<compile_context>
chip_gen: v7x
topology: tpu7x:2x2x1
jax: 0.10.0
libtpu: 0.0.40
codegen_flags: <defaults>
</compile_context>

<pallas_src>
import functools

import jax
import jax.numpy as jnp
from jax.experimental import pallas as pl
from jax.experimental.pallas import tpu as pltpu


def _lp_conv_kernel(x_ref, w_ref, shift_ref, o_ref, *,
                    kh_size, kw_size, stride, th, w_out):
    # x_ref:     (1, C_in, H_pad, W_pad)   one padded image (resident across row tiles)
    # w_ref:     (KH*KW, C_out, C_in)      per-tap 1x1 weight matrices, BN-scale folded in
    # shift_ref: (C_out, 1)                folded conv-bias + BN shift
    # o_ref:     (1, C_out, TH*W_out)      one lane-dense output row tile
    c_in = x_ref.shape[1]

    t = pl.program_id(1)                                   # output row-tile index
    r0 = pl.multiple_of(t * (th * stride), th * stride)    # first padded input row of tile

    acc = jnp.zeros(o_ref.shape[1:], jnp.float32)          # (C_out, TH*W_out)
    for kh in range(kh_size):
        for kw in range(kw_size):
            if stride == 1:
                win = x_ref[0, :, pl.ds(r0 + kh, th), pl.ds(kw, w_out)]
            else:
                # best-effort strided path (demo below uses stride=1)
                win = x_ref[0, :, pl.ds(r0 + kh, th, stride),
                            pl.ds(kw, w_out, stride)]
            # (C_in, TH, W_out) -> (C_in, TH*W_out); per-tap 1x1 conv == matmul (MXU)
            acc = acc + jnp.dot(w_ref[kh * kw_size + kw],
                                win.reshape(c_in, th * w_out),
                                preferred_element_type=jnp.float32)

    y = acc + shift_ref[...]                 # folded conv-bias + BatchNorm (eval)
    y = jnp.where(y >= 0, y, 0.1 * y)        # LeakyReLU(0.1)
    o_ref[...] = y[None].astype(o_ref.dtype)


def _pick_row_tile(h_out, w_out, max_tile_elems=64 * 1024):
    """Largest row tile TH that divides H_out, keeps TH*W_out a multiple of 128
    lanes (unless it's the full image) and bounds the output tile size."""
    for th in range(h_out, 0, -1):
        if h_out % th:
            continue
        if th * w_out > max_tile_elems:
            continue
        if th < h_out and (th * w_out) % 128 != 0:
            continue
        return th
    return h_out


def lp_conv_forward(x_nchw, params, *, stride=1, padding=0, eps=1e-5):
    """Equivalent of LPConv.forward(x) (PyTorch, NCHW, eval-mode BatchNorm)."""
    w, b, gamma, beta, running_mean, running_var = params
    N, C_in, H, W = x_nchw.shape
    C_out, _, KH, KW = w.shape

    H_out = (H + 2 * padding - KH) // stride + 1
    W_out = (W + 2 * padding - KW) // stride + 1

    # Fold eval-mode BatchNorm (+ conv bias) into the weights / a per-channel shift.
    scale = gamma / jnp.sqrt(running_var + eps)                       # (C_out,)
    w_folded = w.astype(jnp.float32) * scale[:, None, None, None]     # (C_out,C_in,KH,KW)
    shift = (b - running_mean) * scale + beta                         # (C_out,)

    # (KH*KW, C_out, C_in): one small matmul weight per conv tap.
    w_taps = jnp.transpose(w_folded, (2, 3, 0, 1)).reshape(KH * KW, C_out, C_in)
    shift2d = shift.reshape(C_out, 1).astype(jnp.float32)

    # Zero-pad spatially (NCHW kept; channels stay on the leading/sublane side).
    x_pad = jnp.pad(x_nchw.astype(jnp.float32),
                    ((0, 0), (0, 0), (padding, padding), (padding, padding)))
    H_pad, W_pad = H + 2 * padding, W + 2 * padding

    TH = _pick_row_tile(H_out, W_out)
    grid = (N, H_out // TH)

    kernel = functools.partial(_lp_conv_kernel, kh_size=KH, kw_size=KW,
                               stride=stride, th=TH, w_out=W_out)

    out_flat = pl.pallas_call(
        kernel,
        out_shape=jax.ShapeDtypeStruct((N, C_out, H_out * W_out), jnp.float32),
        grid=grid,
        in_specs=[
            # Whole padded image per batch element; same block for every row
            # tile of that image -> stays resident in VMEM across the t axis.
            pl.BlockSpec((1, C_in, H_pad, W_pad), lambda n, t: (n, 0, 0, 0)),
            pl.BlockSpec((KH * KW, C_out, C_in), lambda n, t: (0, 0, 0)),
            pl.BlockSpec((C_out, 1), lambda n, t: (0, 0)),
        ],
        # Lane-dense output tile: last dim TH*W_out (multiple of 128 lanes).
        out_specs=pl.BlockSpec((1, C_out, TH * W_out), lambda n, t: (n, 0, t)),
        compiler_params=pltpu.CompilerParams(
            dimension_semantics=("parallel", "arbitrary")),
    )(x_pad, w_taps, shift2d)

    # Free reshape (no data movement): (N, C_out, H_out*W_out) -> NCHW.
    return out_flat.reshape(N, C_out, H_out, W_out)


def _reference_forward(x, params, stride, padding, eps=1e-5):
    """Pure-JAX reference (Conv2d -> eval BatchNorm -> LeakyReLU(0.1))."""
    w, b, gamma, beta, mean, var = params
    y = jax.lax.conv_general_dilated(
        x, w, window_strides=(stride, stride),
        padding=((padding, padding), (padding, padding)),
        dimension_numbers=('NCHW', 'OIHW', 'NCHW'))
    y = y + b[None, :, None, None]
    y = (y - mean[None, :, None, None]) / jnp.sqrt(var[None, :, None, None] + eps)
    y = y * gamma[None, :, None, None] + beta[None, :, None, None]
    return jnp.where(y >= 0, y, 0.1 * y)


def _make_params(key, c_in, c_out, k):
    ks = jax.random.split(key, 6)
    w = 0.2 * jax.random.normal(ks[0], (c_out, c_in, k, k), jnp.float32)
    b = 0.1 * jax.random.normal(ks[1], (c_out,), jnp.float32)
    gamma = 1.0 + 0.1 * jax.random.normal(ks[2], (c_out,), jnp.float32)
    beta = 0.1 * jax.random.normal(ks[3], (c_out,), jnp.float32)
    mean = 0.1 * jax.random.normal(ks[4], (c_out,), jnp.float32)
    var = 0.5 + jax.random.uniform(ks[5], (c_out,), jnp.float32)
    return (w, b, gamma, beta, mean, var)


if __name__ == "__main__":
    key = jax.random.PRNGKey(0)
    k_x1, k_p1, k_x2, k_p2 = jax.random.split(key, 4)

    # Config 1: LPConv(4, 8, kernel_size=3, stride=1, padding=1), x: (2, 4, 16, 16)
    x1 = jax.random.normal(k_x1, (2, 4, 16, 16), jnp.float32)
    params1 = _make_params(k_p1, c_in=4, c_out=8, k=3)
    out1 = jax.block_until_ready(lp_conv_forward(x1, params1, stride=1, padding=1))
    ref1 = _reference_forward(x1, params1, stride=1, padding=1)
    assert out1.shape == (2, 8, 16, 16), out1.shape
    assert jnp.allclose(out1, ref1, atol=1e-4, rtol=1e-4), "config1 mismatch vs reference"

    # Config 2: LPConv(8, 4, kernel_size=1) (stride=1, padding=0), x: (2, 8, 16, 16)
    x2 = jax.random.normal(k_x2, (2, 8, 16, 16), jnp.float32)
    params2 = _make_params(k_p2, c_in=8, c_out=4, k=1)
    out2 = jax.block_until_ready(lp_conv_forward(x2, params2, stride=1, padding=0))
    ref2 = _reference_forward(x2, params2, stride=1, padding=0)
    assert out2.shape == (2, 4, 16, 16), out2.shape
    assert jnp.allclose(out2, ref2, atol=1e-4, rtol=1e-4), "config2 mismatch vs reference"

    print("KERNEL_OK")
</pallas_src>

<mosaic_0001>
module attributes {stable_mosaic.version = 11 : i64} {
  func.func @_lp_conv_kernel(%arg0: i32, %arg1: i32, %arg2: memref<1x4x18x18xf32, #tpu.memory_space<vmem>>, %arg3: memref<9x8x4xf32, #tpu.memory_space<vmem>>, %arg4: memref<8x1xf32, #tpu.memory_space<vmem>>, %arg5: memref<1x8x256xf32, #tpu.memory_space<vmem>>) attributes {dimension_semantics = [#tpu.dimension_semantics<parallel>, #tpu.dimension_semantics<arbitrary>], iteration_bounds = array<i64: 2, 1>, scalar_prefetch = 0 : i64, scratch_operands = 0 : i64, tpu.core_type = #tpu.core_type<tc>, window_params = [{transform_indices = @transform_0, window_bounds = array<i64: 1, 4, 18, 18>}, {pipeline_mode = #tpu.pipeline_mode<synchronous>, transform_indices = @transform_1, window_bounds = array<i64: 9, 8, 4>}, {pipeline_mode = #tpu.pipeline_mode<synchronous>, transform_indices = @transform_2, window_bounds = array<i64: 8, 1>}, {transform_indices = @transform_3, window_bounds = array<i64: 1, 8, 256>}]} {
    %c16_i32 = arith.constant 16 : i32
    %0 = arith.muli %arg1, %c16_i32 : i32
    %1 = tpu.assume_multiple %0, 16 : i32
    %cst = arith.constant 0.000000e+00 : f32
    %2 = vector.broadcast %cst : f32 to vector<8x256xf32>
    %c0_i32 = arith.constant 0 : i32
    %3 = arith.addi %1, %c0_i32 : i32
    %c0 = arith.constant 0 : index
    %c0_0 = arith.constant 0 : index
    %4 = arith.index_cast %3 : i32 to index
    %c0_1 = arith.constant 0 : index
    %5 = vector.load %arg2[%c0, %c0_0, %4, %c0_1] : memref<1x4x18x18xf32, #tpu.memory_space<vmem>>, vector<1x4x16x16xf32>
    %6 = vector.shape_cast %5 : vector<1x4x16x16xf32> to vector<4x16x16xf32>
    %c0_2 = arith.constant 0 : index
    %c0_3 = arith.constant 0 : index
    %c0_4 = arith.constant 0 : index
    %7 = vector.load %arg3[%c0_2, %c0_3, %c0_4] : memref<9x8x4xf32, #tpu.memory_space<vmem>>, vector<1x8x4xf32>
    %8 = vector.shape_cast %7 : vector<1x8x4xf32> to vector<8x4xf32>
    %9 = vector.shape_cast %6 : vector<4x16x16xf32> to vector<4x256xf32>
    %cst_5 = arith.constant dense<0.000000e+00> : vector<8x256xf32>
    %10 = tpu.matmul %8, %9, %cst_5 {dimension_numbers = #tpu.dot_dimension_numbers<[1], [0], [0], [1], [0, 0, 1, 1], [], []>} : vector<8x4xf32>, vector<4x256xf32>, vector<8x256xf32> -> vector<8x256xf32>
    %11 = arith.addf %2, %10 : vector<8x256xf32>
    %c0_i32_6 = arith.constant 0 : i32
    %12 = arith.addi %1, %c0_i32_6 : i32
    %c0_7 = arith.constant 0 : index
    %c0_8 = arith.constant 0 : index
    %13 = arith.index_cast %12 : i32 to index
    %c1 = arith.constant 1 : index
    %14 = vector.load %arg2[%c0_7, %c0_8, %13, %c1] : memref<1x4x18x18xf32, #tpu.memory_space<vmem>>, vector<1x4x16x16xf32>
    %15 = vector.shape_cast %14 : vector<1x4x16x16xf32> to vector<4x16x16xf32>
    %c1_9 = arith.constant 1 : index
    %c0_10 = arith.constant 0 : index
    %c0_11 = arith.constant 0 : index
    %16 = vector.load %arg3[%c1_9, %c0_10, %c0_11] : memref<9x8x4xf32, #tpu.memory_space<vmem>>, vector<1x8x4xf32>
    %17 = vector.shape_cast %16 : vector<1x8x4xf32> to vector<8x4xf32>
    %18 = vector.shape_cast %15 : vector<4x16x16xf32> to vector<4x256xf32>
    %cst_12 = arith.constant dense<0.000000e+00> : vector<8x256xf32>
    %19 = tpu.matmul %17, %18, %cst_12 {dimension_numbers = #tpu.dot_dimension_numbers<[1], [0], [0], [1], [0, 0, 1, 1], [], []>} : vector<8x4xf32>, vector<4x256xf32>, vector<8x256xf32> -> vector<8x256xf32>
    %20 = arith.addf %11, %19 : vector<8x256xf32>
    %c0_i32_13 = arith.constant 0 : i32
    %21 = arith.addi %1, %c0_i32_13 : i32
    %c0_14 = arith.constant 0 : index
    %c0_15 = arith.constant 0 : index
    %22 = arith.index_cast %21 : i32 to index
    %c2 = arith.constant 2 : index
    %23 = vector.load %arg2[%c0_14, %c0_15, %22, %c2] : memref<1x4x18x18xf32, #tpu.memory_space<vmem>>, vector<1x4x16x16xf32>
    %24 = vector.shape_cast %23 : vector<1x4x16x16xf32> to vector<4x16x16xf32>
    %c2_16 = arith.constant 2 : index
    %c0_17 = arith.constant 0 : index
    %c0_18 = arith.constant 0 : index
    %25 = vector.load %arg3[%c2_16, %c0_17, %c0_18] : memref<9x8x4xf32, #tpu.memory_space<vmem>>, vector<1x8x4xf32>
    %26 = vector.shape_cast %25 : vector<1x8x4xf32> to vector<8x4xf32>
    %27 = vector.shape_cast %24 : vector<4x16x16xf32> to vector<4x256xf32>
    %cst_19 = arith.constant dense<0.000000e+00> : vector<8x256xf32>
    %28 = tpu.matmul %26, %27, %cst_19 {dimension_numbers = #tpu.dot_dimension_numbers<[1], [0], [0], [1], [0, 0, 1, 1], [], []>} : vector<8x4xf32>, vector<4x256xf32>, vector<8x256xf32> -> vector<8x256xf32>
    %29 = arith.addf %20, %28 : vector<8x256xf32>
    %c1_i32 = arith.constant 1 : i32
    %30 = arith.addi %1, %c1_i32 : i32
    %c0_20 = arith.constant 0 : index
    %c0_21 = arith.constant 0 : index
    %31 = arith.index_cast %30 : i32 to index
    %c0_22 = arith.constant 0 : index
    %32 = vector.load %arg2[%c0_20, %c0_21, %31, %c0_22] : memref<1x4x18x18xf32, #tpu.memory_space<vmem>>, vector<1x4x16x16xf32>
    %33 = vector.shape_cast %32 : vector<1x4x16x16xf32> to vector<4x16x16xf32>
    %c3 = arith.constant 3 : index
    %c0_23 = arith.constant 0 : index
    %c0_24 = arith.constant 0 : index
    %34 = vector.load %arg3[%c3, %c0_23, %c0_24] : memref<9x8x4xf32, #tpu.memory_space<vmem>>, vector<1x8x4xf32>
    %35 = vector.shape_cast %34 : vector<1x8x4xf32> to vector<8x4xf32>
    %36 = vector.shape_cast %33 : vector<4x16x16xf32> to vector<4x256xf32>
    %cst_25 = arith.constant dense<0.000000e+00> : vector<8x256xf32>
    %37 = tpu.matmul %35, %36, %cst_25 {dimension_numbers = #tpu.dot_dimension_numbers<[1], [0], [0], [1], [0, 0, 1, 1], [], []>} : vector<8x4xf32>, vector<4x256xf32>, vector<8x256xf32> -> vector<8x256xf32>
    %38 = arith.addf %29, %37 : vector<8x256xf32>
    %c1_i32_26 = arith.constant 1 : i32
    %39 = arith.addi %1, %c1_i32_26 : i32
    %c0_27 = arith.constant 0 : index
    %c0_28 = arith.constant 0 : index
    %40 = arith.index_cast %39 : i32 to index
    %c1_29 = arith.constant 1 : index
    %41 = vector.load %arg2[%c0_27, %c0_28, %40, %c1_29] : memref<1x4x18x18xf32, #tpu.memory_space<vmem>>, vector<1x4x16x16xf32>
    %42 = vector.shape_cast %41 : vector<1x4x16x16xf32> to vector<4x16x16xf32>
    %c4 = arith.constant 4 : index
    %c0_30 = arith.constant 0 : index
    %c0_31 = arith.constant 0 : index
    %43 = vector.load %arg3[%c4, %c0_30, %c0_31] : memref<9x8x4xf32, #tpu.memory_space<vmem>>, vector<1x8x4xf32>
    %44 = vector.shape_cast %43 : vector<1x8x4xf32> to vector<8x4xf32>
    %45 = vector.shape_cast %42 : vector<4x16x16xf32> to vector<4x256xf32>
    %cst_32 = arith.constant dense<0.000000e+00> : vector<8x256xf32>
    %46 = tpu.matmul %44, %45, %cst_32 {dimension_numbers = #tpu.dot_dimension_numbers<[1], [0], [0], [1], [0, 0, 1, 1], [], []>} : vector<8x4xf32>, vector<4x256xf32>, vector<8x256xf32> -> vector<8x256xf32>
    %47 = arith.addf %38, %46 : vector<8x256xf32>
    %c1_i32_33 = arith.constant 1 : i32
    %48 = arith.addi %1, %c1_i32_33 : i32
    %c0_34 = arith.constant 0 : index
    %c0_35 = arith.constant 0 : index
    %49 = arith.index_cast %48 : i32 to index
    %c2_36 = arith.constant 2 : index
    %50 = vector.load %arg2[%c0_34, %c0_35, %49, %c2_36] : memref<1x4x18x18xf32, #tpu.memory_space<vmem>>, vector<1x4x16x16xf32>
    %51 = vector.shape_cast %50 : vector<1x4x16x16xf32> to vector<4x16x16xf32>
    %c5 = arith.constant 5 : index
    %c0_37 = arith.constant 0 : index
    %c0_38 = arith.constant 0 : index
    %52 = vector.load %arg3[%c5, %c0_37, %c0_38] : memref<9x8x4xf32, #tpu.memory_space<vmem>>, vector<1x8x4xf32>
    %53 = vector.shape_cast %52 : vector<1x8x4xf32> to vector<8x4xf32>
    %54 = vector.shape_cast %51 : vector<4x16x16xf32> to vector<4x256xf32>
    %cst_39 = arith.constant dense<0.000000e+00> : vector<8x256xf32>
    %55 = tpu.matmul %53, %54, %cst_39 {dimension_numbers = #tpu.dot_dimension_numbers<[1], [0], [0], [1], [0, 0, 1, 1], [], []>} : vector<8x4xf32>, vector<4x256xf32>, vector<8x256xf32> -> vector<8x256xf32>
    %56 = arith.addf %47, %55 : vector<8x256xf32>
    %c2_i32 = arith.constant 2 : i32
    %57 = arith.addi %1, %c2_i32 : i32
    %c0_40 = arith.constant 0 : index
    %c0_41 = arith.constant 0 : index
    %58 = arith.index_cast %57 : i32 to index
    %c0_42 = arith.constant 0 : index
    %59 = vector.load %arg2[%c0_40, %c0_41, %58, %c0_42] : memref<1x4x18x18xf32, #tpu.memory_space<vmem>>, vector<1x4x16x16xf32>
    %60 = vector.shape_cast %59 : vector<1x4x16x16xf32> to vector<4x16x16xf32>
    %c6 = arith.constant 6 : index
    %c0_43 = arith.constant 0 : index
    %c0_44 = arith.constant 0 : index
    %61 = vector.load %arg3[%c6, %c0_43, %c0_44] : memref<9x8x4xf32, #tpu.memory_space<vmem>>, vector<1x8x4xf32>
    %62 = vector.shape_cast %61 : vector<1x8x4xf32> to vector<8x4xf32>
    %63 = vector.shape_cast %60 : vector<4x16x16xf32> to vector<4x256xf32>
    %cst_45 = arith.constant dense<0.000000e+00> : vector<8x256xf32>
    %64 = tpu.matmul %62, %63, %cst_45 {dimension_numbers = #tpu.dot_dimension_numbers<[1], [0], [0], [1], [0, 0, 1, 1], [], []>} : vector<8x4xf32>, vector<4x256xf32>, vector<8x256xf32> -> vector<8x256xf32>
    %65 = arith.addf %56, %64 : vector<8x256xf32>
    %c2_i32_46 = arith.constant 2 : i32
    %66 = arith.addi %1, %c2_i32_46 : i32
    %c0_47 = arith.constant 0 : index
    %c0_48 = arith.constant 0 : index
    %67 = arith.index_cast %66 : i32 to index
    %c1_49 = arith.constant 1 : index
    %68 = vector.load %arg2[%c0_47, %c0_48, %67, %c1_49] : memref<1x4x18x18xf32, #tpu.memory_space<vmem>>, vector<1x4x16x16xf32>
    %69 = vector.shape_cast %68 : vector<1x4x16x16xf32> to vector<4x16x16xf32>
    %c7 = arith.constant 7 : index
    %c0_50 = arith.constant 0 : index
    %c0_51 = arith.constant 0 : index
    %70 = vector.load %arg3[%c7, %c0_50, %c0_51] : memref<9x8x4xf32, #tpu.memory_space<vmem>>, vector<1x8x4xf32>
    %71 = vector.shape_cast %70 : vector<1x8x4xf32> to vector<8x4xf32>
    %72 = vector.shape_cast %69 : vector<4x16x16xf32> to vector<4x256xf32>
    %cst_52 = arith.constant dense<0.000000e+00> : vector<8x256xf32>
    %73 = tpu.matmul %71, %72, %cst_52 {dimension_numbers = #tpu.dot_dimension_numbers<[1], [0], [0], [1], [0, 0, 1, 1], [], []>} : vector<8x4xf32>, vector<4x256xf32>, vector<8x256xf32> -> vector<8x256xf32>
    %74 = arith.addf %65, %73 : vector<8x256xf32>
    %c2_i32_53 = arith.constant 2 : i32
    %75 = arith.addi %1, %c2_i32_53 : i32
    %c0_54 = arith.constant 0 : index
    %c0_55 = arith.constant 0 : index
    %76 = arith.index_cast %75 : i32 to index
    %c2_56 = arith.constant 2 : index
    %77 = vector.load %arg2[%c0_54, %c0_55, %76, %c2_56] : memref<1x4x18x18xf32, #tpu.memory_space<vmem>>, vector<1x4x16x16xf32>
    %78 = vector.shape_cast %77 : vector<1x4x16x16xf32> to vector<4x16x16xf32>
    %c8 = arith.constant 8 : index
    %c0_57 = arith.constant 0 : index
    %c0_58 = arith.constant 0 : index
    %79 = vector.load %arg3[%c8, %c0_57, %c0_58] : memref<9x8x4xf32, #tpu.memory_space<vmem>>, vector<1x8x4xf32>
    %80 = vector.shape_cast %79 : vector<1x8x4xf32> to vector<8x4xf32>
    %81 = vector.shape_cast %78 : vector<4x16x16xf32> to vector<4x256xf32>
    %cst_59 = arith.constant dense<0.000000e+00> : vector<8x256xf32>
    %82 = tpu.matmul %80, %81, %cst_59 {dimension_numbers = #tpu.dot_dimension_numbers<[1], [0], [0], [1], [0, 0, 1, 1], [], []>} : vector<8x4xf32>, vector<4x256xf32>, vector<8x256xf32> -> vector<8x256xf32>
    %83 = arith.addf %74, %82 : vector<8x256xf32>
    %c0_60 = arith.constant 0 : index
    %c0_61 = arith.constant 0 : index
    %84 = vector.load %arg4[%c0_60, %c0_61] : memref<8x1xf32, #tpu.memory_space<vmem>>, vector<8x1xf32>
    %85 = vector.broadcast %84 : vector<8x1xf32> to vector<8x256xf32>
    %86 = arith.addf %83, %85 : vector<8x256xf32>
    %cst_62 = arith.constant 0.000000e+00 : f32
    %87 = vector.broadcast %cst_62 : f32 to vector<8x256xf32>
    %88 = arith.cmpf oge, %86, %87 : vector<8x256xf32>
    %cst_63 = arith.constant 1.000000e-01 : f32
    %89 = vector.broadcast %cst_63 : f32 to vector<8x256xf32>
    %90 = arith.mulf %89, %86 : vector<8x256xf32>
    %91 = arith.select %88, %86, %90 : vector<8x256xi1>, vector<8x256xf32>
    %92 = vector.shape_cast %91 : vector<8x256xf32> to vector<1x8x256xf32>
    %c0_64 = arith.constant 0 : index
    %c0_65 = arith.constant 0 : index
    %c0_66 = arith.constant 0 : index
    %93 = vector.load %arg5[%c0_64, %c0_65, %c0_66] : memref<1x8x256xf32, #tpu.memory_space<vmem>>, vector<1x8x256xf32>
    tpu.vector_store %arg5[%c0_64, %c0_65, %c0_66], %92 {strides = array<i32>} : memref<1x8x256xf32, #tpu.memory_space<vmem>>, vector<1x8x256xf32>,
    return
  }
  func.func @transform_0(%arg0: i32, %arg1: i32) -> (i32, i32, i32, i32) {
    %c0_i32 = arith.constant 0 : i32
    %c0_i32_0 = arith.constant 0 : i32
    %c0_i32_1 = arith.constant 0 : i32
    %c0_i32_2 = arith.constant 0 : i32
    return %arg0, %c0_i32, %c0_i32_0, %c0_i32_1 : i32, i32, i32, i32
  }
  func.func @transform_1(%arg0: i32, %arg1: i32) -> (i32, i32, i32) {
    %c0_i32 = arith.constant 0 : i32
    %c0_i32_0 = arith.constant 0 : i32
    %c0_i32_1 = arith.constant 0 : i32
    %c0_i32_2 = arith.constant 0 : i32
    return %c0_i32, %c0_i32_0, %c0_i32_1 : i32, i32, i32
  }
  func.func @transform_2(%arg0: i32, %arg1: i32) -> (i32, i32) {
    %c0_i32 = arith.constant 0 : i32
    %c0_i32_0 = arith.constant 0 : i32
    %c0_i32_1 = arith.constant 0 : i32
    return %c0_i32, %c0_i32_0 : i32, i32
  }
  func.func @transform_3(%arg0: i32, %arg1: i32) -> (i32, i32, i32) {
    %c0_i32 = arith.constant 0 : i32
    %c0_i32_0 = arith.constant 0 : i32
    return %arg0, %c0_i32, %arg1 : i32, i32, i32
  }
}

</mosaic_0001>

<llo_original>
// kernel: tpu_custom_call.1
$region0: #{tpu_custom_call.1}
  #allocation0 [shape = 'u32[]', space=smem, size = 0x4, offset = 0x4, fixed_abs, tag = 'smem constant byte address 0x4 - core index']
  #allocation1 [shape = 'u32[144,128]{1,0:T(1,128)}', space=vmem, size = 0x12000, scoped, tag = 'internal scratch']
  %s0 = inlined_call_operand.vmem [shape: f32[2,4,18,18], index: 0, kind: input, shape index: {}]
  %s1 = inlined_call_operand.vmem [shape: f32[9,8,4], index: 1, kind: input, shape index: {}]
  %s2 = inlined_call_operand.vmem [shape: f32[8,1], index: 2, kind: input, shape index: {}]
  %s3 = inlined_call_operand.hbm [shape: f32[2,8,256], index: 3, kind: output, shape index: {}]
  %s4 = sld [smem:[#allocation0]]
  $region45: #{tpu_custom_call.1} parent=0
    _
  %s6 = ssub.s32 1, %s4
  %s7 = scalar_select 0, %s6, %s4
  $region1: #{tpu_custom_call.1} parent=0
    #allocation2 [shape = 'u8[16384]{0}', space=vmem, size = 0x4000, scoped, tag = 'output window, operand 0']
    #allocation3 [shape = 's32[2]{0}', space=sflag, size = 0x8, scoped, tag = 'scoped memory for tpu_custom_call.1']
    %8 = vsyncpa [#allocation3], 0
    %s9 = scalar_lea.sflag [#allocation3], 1
    %10 = vsyncpa %s9, 0
    loop: start=0, step=1, limit=4
    $region2: #{tpu_custom_call.1} parent=1 // loop_pre_header
      _
    $region3: #{tpu_custom_call.1} parent=1 // loop_header
      %s12 = sphi 0, %s16
      %p13 = scmp.ge.s32.totalorder %s12, 4
      %s19 = sphi 0, %s31
      %s20 = sphi 0, %s27
      %s21 = sphi 0, %s19
      %s22 = sphi 0, %s20
      %s23 = sphi 0, %s21
      %s24 = sphi 0, %s22
      %s34 = sphi 0, %s36
      %s37 = sphi 0, %s34
      %s38 = sphi 0, %s37
      %s54 = sphi 0, %s38
      %s58 = sphi 0, %s58
      %s60 = sphi 0, %s58
      %s61 = sphi 0, %s60
      %s75 = sphi 0, %s61
      %s79 = sphi 0, %s79
      %s81 = sphi 0, %s79
      %s82 = sphi 0, %s81
      %s96 = sphi 0, %s82
      %s104 = sphi 0, %s106
      %s107 = sphi 0, %s104
      %s108 = sphi 0, %s107
      %s124 = sphi 0, %s108
    $region4: #{tpu_custom_call.1} parent=1 // loop_header_branch
      %15 = sbr.rel (%p13) target = $region8
    $region5: #{tpu_custom_call.1} parent=1 // loop_body
      %s17 = ssub.s32 %s12, 1
      %s18 = ssub.s32 %s12, 2
      %s25 = sadd.s32 1, %s20
      %p26 = scmp.ge.s32.totalorder %s25, 1
      %s27 = scalar_select %p26, 0, %s25
      %s28 = sadd.s32 1, %s19
      %s29 = scalar_select %p26, %s28, %s19
      %p30 = scmp.ge.s32.totalorder %s29, 2
      %s31 = scalar_select %p30, 0, %s29
      %s32 = ssub.s32 %s19, %s31
      %p33 = scmp.eq.s32.totalorder %s32, 0
      %s35 = sadd.s32 %s34, 1
      %s36 = scalar_select %p33, %s34, %s35
      %p39 = pneg %p33
      %p40 = scmp.eq.s32.totalorder %s12, 1
      %p41 = por %p39, %p40
      %p42 = scmp.ne.s32.totalorder %s34, %s37
      %p43 = scmp.eq.s32.totalorder %s12, 0
      %p44 = por %p42, %p43
      %p45 = scmp.ne.s32.totalorder %s34, %s37
      %p46 = scmp.eq.s32.totalorder %s17, 1
      %p47 = por %p45, %p46
      %p48 = scmp.ne.s32.totalorder %s37, %s38
      %p49 = scmp.eq.s32.totalorder %s17, 0
      %p50 = por %p48, %p49
      %p51 = scmp.ne.s32.totalorder %s37, %s38
      %p52 = scmp.eq.s32.totalorder %s18, 1
      %p53 = por %p51, %p52
      %p55 = scmp.ne.s32.totalorder %s38, %s54
      %p56 = scmp.eq.s32.totalorder %s18, 0
      %p57 = por %p55, %p56
      %s59 = sadd.s32 %s58, 1
      %p62 = scmp.eq.s32.totalorder %s12, 1
      %p63 = scmp.ne.s32.totalorder %s58, %s60
      %p64 = scmp.eq.s32.totalorder %s12, 0
      %p65 = por %p63, %p64
      %p66 = scmp.ne.s32.totalorder %s58, %s60
      %p67 = scmp.eq.s32.totalorder %s17, 1
      %p68 = por %p66, %p67
      %p69 = scmp.ne.s32.totalorder %s60, %s61
      %p70 = scmp.eq.s32.totalorder %s17, 0
      %p71 = por %p69, %p70
      %p72 = scmp.ne.s32.totalorder %s60, %s61
      %p73 = scmp.eq.s32.totalorder %s18, 1
      %p74 = por %p72, %p73
      %p76 = scmp.ne.s32.totalorder %s61, %s75
      %p77 = scmp.eq.s32.totalorder %s18, 0
      %p78 = por %p76, %p77
      %s80 = sadd.s32 %s79, 1
      %p83 = scmp.eq.s32.totalorder %s12, 1
      %p84 = scmp.ne.s32.totalorder %s79, %s81
      %p85 = scmp.eq.s32.totalorder %s12, 0
      %p86 = por %p84, %p85
      %p87 = scmp.ne.s32.totalorder %s79, %s81
      %p88 = scmp.eq.s32.totalorder %s17, 1
      %p89 = por %p87, %p88
      %p90 = scmp.ne.s32.totalorder %s81, %s82
      %p91 = scmp.eq.s32.totalorder %s17, 0
      %p92 = por %p90, %p91
      %p93 = scmp.ne.s32.totalorder %s81, %s82
      %p94 = scmp.eq.s32.totalorder %s18, 1
      %p95 = por %p93, %p94
      %p97 = scmp.ne.s32.totalorder %s82, %s96
      %p98 = scmp.eq.s32.totalorder %s18, 0
      %p99 = por %p97, %p98
      %s100 = ssub.s32 %s19, %s31
      %s101 = ssub.s32 %s20, %s27
      %s102 = sor.u32 %s100, %s101
      %p103 = scmp.eq.s32.totalorder %s102, 0
      %s105 = sadd.s32 %s104, 1
      %s106 = scalar_select %p103, %s104, %s105
      %p109 = pneg %p103
      %p110 = scmp.eq.s32.totalorder %s12, 1
      %p111 = por %p109, %p110
      %p112 = scmp.ne.s32.totalorder %s104, %s107
      %p113 = scmp.eq.s32.totalorder %s12, 0
      %p114 = por %p112, %p113
      %p115 = scmp.ne.s32.totalorder %s104, %s107
      %p116 = scmp.eq.s32.totalorder %s17, 1
      %p117 = por %p115, %p116
      %p118 = scmp.ne.s32.totalorder %s107, %s108
      %p119 = scmp.eq.s32.totalorder %s17, 0
      %p120 = por %p118, %p119
      %p121 = scmp.ne.s32.totalorder %s107, %s108
      %p122 = scmp.eq.s32.totalorder %s18, 1
      %p123 = por %p121, %p122
      %p125 = scmp.ne.s32.totalorder %s108, %s124
      %p126 = scmp.eq.s32.totalorder %s18, 0
      %p127 = por %p125, %p126
      %p128 = scmp.le.s32.totalorder 1, %s12
      %p129 = scmp.lt.s32.totalorder %s12, 3
      %p130 = pnand %p128, %p129
      %p131 = pneg %p130
      // Predicated region
      $region9: #{tpu_custom_call.1} parent=5 // pred_check
        _
      $region10: #{tpu_custom_call.1} parent=5 // pred_check_branch
        %133 = sbr.rel (%p130) target = $region12
      $region11: #{tpu_custom_call.1} parent=5 // pred_region
        %s134 = ssub.s32 %s12, 1
        // Predicated region
        $region13: #{tpu_custom_call.1} parent=11 // pred_check
          %p135 = pneg %p71
        $region14: #{tpu_custom_call.1} parent=11 // pred_check_branch
          %137 = sbr.rel (%p135) target = $region16
        $region15: #{tpu_custom_call.1} parent=11 // pred_region
          _
        $region16: #{tpu_custom_call.1} parent=11 // pred_fallthru
          _
        // Predicated region
        $region17: #{tpu_custom_call.1} parent=11 // pred_check
          %p138 = pneg %p92
        $region18: #{tpu_custom_call.1} parent=11 // pred_check_branch
          %140 = sbr.rel (%p138) target = $region20
        $region19: #{tpu_custom_call.1} parent=11 // pred_region
          _
        $region20: #{tpu_custom_call.1} parent=11 // pred_fallthru
          _
      $region12: #{tpu_custom_call.1} parent=5 // pred_fallthru
        _
      %p141 = scmp.lt.s32.totalorder %s12, 2
      // Predicated region
      $region21: #{tpu_custom_call.1} parent=5 // pred_check
        %p142 = pneg %p141
      $region22: #{tpu_custom_call.1} parent=5 // pred_check_branch
        %144 = sbr.rel (%p142) target = $region24
      $region23: #{tpu_custom_call.1} parent=5 // pred_region
        // Predicated region
        $region25: #{tpu_custom_call.1} parent=23 // pred_check
          %p145 = pneg %p44
        $region26: #{tpu_custom_call.1} parent=23 // pred_check_branch
          %147 = sbr.rel (%p145) target = $region28
        $region27: #{tpu_custom_call.1} parent=23 // pred_region
          %p148 = scmp.lt.s32.totalorder %s19, 1
          %s149 = scalar_select %p148, %s19, 1
          %s150 = smul.addr %s149, 12
          %s151 = smul.addr %s150, 8
          %s152 = scalar_lea.vmem %s0, %s151
        $region28: #{tpu_custom_call.1} parent=23 // pred_fallthru
          _
      $region24: #{tpu_custom_call.1} parent=5 // pred_fallthru
        _
      %p153 = scmp.le.s32.totalorder 1, %s12
      %p154 = scmp.lt.s32.totalorder %s12, 3
      %p155 = pnand %p153, %p154
      %p156 = pneg %p155
      // Predicated region
      $region29: #{tpu_custom_call.1} parent=5 // pred_check
        _
      $region30: #{tpu_custom_call.1} parent=5 // pred_check_branch
        %158 = sbr.rel (%p155) target = $region32
      $region31: #{tpu_custom_call.1} parent=5 // pred_region
        %s159 = ssub.s32 %s12, 1
        %p160 = scmp.lt.s32.totalorder %s21, 1
        %s161 = scalar_select %p160, %s21, 1
        %s162 = smul.addr %s161, 12
        %s163 = smul.addr %s162, 8
        %s164 = scalar_lea.vmem %s0, %s163
        %p165 = pneg %p50
        %p166 = pneg %p47
        %p167 = pneg %p71
        %p168 = pneg %p68
        %p169 = pneg %p92
        %p170 = pneg %p89
        %p171 = pneg %p120
        %p172 = pneg %p117
        %s173 = sand.u32 %s107, 1
        %s174 = scalar_lea.sflag [#allocation3], %s173
        %s175 = sand.u32 %s107, 1
        %s176 = smul.addr %s175, 16
        %s177 = scalar_lea.vmem [#allocation2], %s176
        %p178 = scmp.lt.s32.totalorder %s21, 1
        %s179 = scalar_select %p178, %s21, 1
        %s180 = smul.addr %s179, 12
        %s181 = smul.addr %s180, 8
        %s182 = scalar_lea.vmem %s0, %s181
        %s183 = smul.u32 2, %s22
        %s184 = smul.u32 %s22, 16
        %s185 = scalar_lea.vmem %s182, %s184
        %v186 = vld [vmem:[%s185] sm:$0xff]
        %v187 = vld [vmem:[%s185 + $0x8] sm:$0xff]
        %v188 = vld [vmem:[%s185 + $0x18] sm:$0xff]
        %v189 = vld [vmem:[%s185 + $0x20] sm:$0xff]
        %v190 = vld [vmem:[%s185 + $0x30] sm:$0xff]
        %v191 = vld [vmem:[%s185 + $0x38] sm:$0xff]
        %v192 = vld [vmem:[%s185 + $0x48] sm:$0xff]
        %v193 = vld [vmem:[%s185 + $0x50] sm:$0xff]
        %v194 = vld [vmem:[%s1] sm:$0xff]
        %v195 = vcombine.low %v186, %v190
        %v196 = vcombine.high %v186, %v190
        %v198 = vunpack.c.l.s4 1983009808
        %v199 = vunpack.c.0.s8 %v198
        %v200 = vlaneseq
        %v201 = vshrl.u32 %v200, 7
        %v202 = vsub.s32 %v199, %v201
        %v203 = vrot.slane %v195, %v202
        %v205 = vunpack.c.l.s4 1983009808
        %v206 = vunpack.c.0.s8 %v205
        %v207 = vlaneseq
        %v208 = vshrl.u32 %v207, 7
        %v209 = vsub.s32 %v206, %v208
        %v210 = vrot.slane %v196, %v209
        %v211 = vcombine.low %v188, %v192
        %v212 = vcombine.high %v188, %v192
        %v214 = vunpack.c.l.s4 1983009808
        %v215 = vunpack.c.0.s8 %v214
        %v216 = vlaneseq
        %v217 = vshrl.u32 %v216, 7
        %v218 = vsub.s32 %v215, %v217
        %v219 = vrot.slane %v211, %v218
        %v221 = vunpack.c.l.s4 1983009808
        %v222 = vunpack.c.0.s8 %v221
        %v223 = vlaneseq
        %v224 = vshrl.u32 %v223, 7
        %v225 = vsub.s32 %v222, %v224
        %v226 = vrot.slane %v212, %v225
        %v227 = vcombine.low %v203, %v219
        %v228 = vcombine.high %v203, %v219
        %v230 = vunpack.c.l.s4 1934713408
        %v231 = vunpack.c.0.s8 %v230
        %v232 = vlaneseq
        %v233 = vshrl.u32 %v232, 7
        %v234 = vsub.s32 %v231, %v233
        %v235 = vrot.slane %v227, %v234
        %v237 = vunpack.c.l.s4 1934713408
        %v238 = vunpack.c.0.s8 %v237
        %v239 = vlaneseq
        %v240 = vshrl.u32 %v239, 7
        %v241 = vsub.s32 %v238, %v240
        %v242 = vrot.slane %v228, %v241
        %v243 = vcombine.low %v210, %v226
        %v244 = vcombine.high %v210, %v226
        %v246 = vunpack.c.l.s4 1934713408
        %v247 = vunpack.c.0.s8 %v246
        %v248 = vlaneseq
        %v249 = vshrl.u32 %v248, 7
        %v250 = vsub.s32 %v247, %v249
        %v251 = vrot.slane %v243, %v250
        %v253 = vunpack.c.l.s4 1934713408
        %v254 = vunpack.c.0.s8 %v253
        %v255 = vlaneseq
        %v256 = vshrl.u32 %v255, 7
        %v257 = vsub.s32 %v254, %v256
        %v258 = vrot.slane %v244, %v257
        %v259 = vcombine.high %v235, 0.0
        %v260 = vcombine.high %v242, 0.0
        %v261 = vcombine.high %v251, 0.0
        %v262 = vcombine.high %v258, 0.0
        %v263 = vcombine.low %v187, %v191
        %v264 = vcombine.high %v187, %v191
        %v266 = vunpack.c.l.s4 1983009808
        %v267 = vunpack.c.0.s8 %v266
        %v268 = vlaneseq
        %v269 = vshrl.u32 %v268, 7
        %v270 = vsub.s32 %v267, %v269
        %v271 = vrot.slane %v263, %v270
        %v273 = vunpack.c.l.s4 1983009808
        %v274 = vunpack.c.0.s8 %v273
        %v275 = vlaneseq
        %v276 = vshrl.u32 %v275, 7
        %v277 = vsub.s32 %v274, %v276
        %v278 = vrot.slane %v264, %v277
        %v279 = vcombine.low %v189, %v193
        %v280 = vcombine.high %v189, %v193
        %v282 = vunpack.c.l.s4 1983009808
        %v283 = vunpack.c.0.s8 %v282
        %v284 = vlaneseq
        %v285 = vshrl.u32 %v284, 7
        %v286 = vsub.s32 %v283, %v285
        %v287 = vrot.slane %v279, %v286
        %v289 = vunpack.c.l.s4 1983009808
        %v290 = vunpack.c.0.s8 %v289
        %v291 = vlaneseq
        %v292 = vshrl.u32 %v291, 7
        %v293 = vsub.s32 %v290, %v292
        %v294 = vrot.slane %v280, %v293
        %v295 = vcombine.low %v271, %v287
        %v296 = vcombine.high %v271, %v287
        %v298 = vunpack.c.l.s4 1934713408
        %v299 = vunpack.c.0.s8 %v298
        %v300 = vlaneseq
        %v301 = vshrl.u32 %v300, 7
        %v302 = vsub.s32 %v299, %v301
        %v303 = vrot.slane %v295, %v302
        %v305 = vunpack.c.l.s4 1934713408
        %v306 = vunpack.c.0.s8 %v305
        %v307 = vlaneseq
        %v308 = vshrl.u32 %v307, 7
        %v309 = vsub.s32 %v306, %v308
        %v310 = vrot.slane %v296, %v309
        %v311 = vcombine.low %v278, %v294
        %v312 = vcombine.high %v278, %v294
        %v314 = vunpack.c.l.s4 1934713408
        %v315 = vunpack.c.0.s8 %v314
        %v316 = vlaneseq
        %v317 = vshrl.u32 %v316, 7
        %v318 = vsub.s32 %v315, %v317
        %v319 = vrot.slane %v311, %v318
        %v321 = vunpack.c.l.s4 1934713408
        %v322 = vunpack.c.0.s8 %v321
        %v323 = vlaneseq
        %v324 = vshrl.u32 %v323, 7
        %v325 = vsub.s32 %v322, %v324
        %v326 = vrot.slane %v312, %v325
        %v327 = vcombine.high %v303, 0.0
        %v328 = vcombine.high %v310, 0.0
        %v329 = vcombine.high %v319, 0.0
        %v330 = vcombine.high %v326, 0.0
        %332 = vrot.lane.b32.xlu0 %v259, 16
        %v333 = vpop.permute.xlu0 %332
        %336 = vrot.lane.b32.xlu0 %v242, 32
        %v337 = vpop.permute.xlu0 %336
        %340 = vrot.lane.b32.xlu0 %v260, 48
        %v341 = vpop.permute.xlu0 %340
        %344 = vrot.lane.b32.xlu0 %v251, 64
        %v345 = vpop.permute.xlu0 %344
        %348 = vrot.lane.b32.xlu0 %v261, 80
        %v349 = vpop.permute.xlu0 %348
        %352 = vrot.lane.b32.xlu0 %v258, 96
        %v353 = vpop.permute.xlu0 %352
        %356 = vrot.lane.b32.xlu0 %v262, 112
        %v357 = vpop.permute.xlu0 %356
        %360 = vrot.lane.b32.xlu0 %v327, 16
        %v361 = vpop.permute.xlu0 %360
        %364 = vrot.lane.b32.xlu0 %v310, 32
        %v365 = vpop.permute.xlu0 %364
        %368 = vrot.lane.b32.xlu0 %v328, 48
        %v369 = vpop.permute.xlu0 %368
        %372 = vrot.lane.b32.xlu0 %v319, 64
        %v373 = vpop.permute.xlu0 %372
        %376 = vrot.lane.b32.xlu0 %v329, 80
        %v377 = vpop.permute.xlu0 %376
        %380 = vrot.lane.b32.xlu0 %v326, 96
        %v381 = vpop.permute.xlu0 %380
        %384 = vrot.lane.b32.xlu0 %v330, 112
        %v385 = vpop.permute.xlu0 %384
        %vm387 = vcmask 130048
        %v388 = vsel %vm387, %v235, %v333
        %vm389 = vcmask 261120
        %v390 = vsel %vm389, %v388, %v337
        %vm391 = vcmask 392192
        %v392 = vsel %vm391, %v390, %v341
        %vm393 = vcmask 523264
        %v394 = vsel %vm393, %v392, %v345
        %vm395 = vcmask 654336
        %v396 = vsel %vm395, %v394, %v349
        %vm397 = vcmask 785408
        %v398 = vsel %vm397, %v396, %v353
        %vm399 = vcmask 916480
        %v400 = vsel %vm399, %v398, %v357
        %v401 = vsel %vm387, %v303, %v361
        %v402 = vsel %vm389, %v401, %v365
        %v403 = vsel %vm391, %v402, %v369
        %v404 = vsel %vm393, %v403, %v373
        %v405 = vsel %vm395, %v404, %v377
        %v406 = vsel %vm397, %v405, %v381
        %v407 = vsel %vm399, %v406, %v385
        %s408 = scalar_lea.vmem %s1, 8
        %v409 = vld [vmem:[%s408] sm:$0xff]
        %418 = vrot.lane.b32.xlu0 %v186, 127
        %v419 = vpop.permute.xlu0 %418
        %420 = vrot.lane.b32.xlu0 %v187, 127
        %v421 = vpop.permute.xlu0 %420
        %422 = vrot.lane.b32.xlu0 %v188, 127
        %v423 = vpop.permute.xlu0 %422
        %424 = vrot.lane.b32.xlu0 %v189, 127
        %v425 = vpop.permute.xlu0 %424
        %426 = vrot.lane.b32.xlu0 %v190, 127
        %v427 = vpop.permute.xlu0 %426
        %428 = vrot.lane.b32.xlu0 %v191, 127
        %v429 = vpop.permute.xlu0 %428
        %430 = vrot.lane.b32.xlu0 %v192, 127
        %v431 = vpop.permute.xlu0 %430
        %432 = vrot.lane.b32.xlu0 %v193, 127
        %v433 = vpop.permute.xlu0 %432
        %v442 = vcombine.low %v419, %v427
        %v443 = vcombine.high %v419, %v427
        %v445 = vunpack.c.l.s4 1983009808
        %v446 = vunpack.c.0.s8 %v445
        %v447 = vlaneseq
        %v448 = vshrl.u32 %v447, 7
        %v449 = vsub.s32 %v446, %v448
        %v450 = vrot.slane %v442, %v449
        %v452 = vunpack.c.l.s4 1983009808
        %v453 = vunpack.c.0.s8 %v452
        %v454 = vlaneseq
        %v455 = vshrl.u32 %v454, 7
        %v456 = vsub.s32 %v453, %v455
        %v457 = vrot.slane %v443, %v456
        %v458 = vcombine.low %v423, %v431
        %v459 = vcombine.high %v423, %v431
        %v461 = vunpack.c.l.s4 1983009808
        %v462 = vunpack.c.0.s8 %v461
        %v463 = vlaneseq
        %v464 = vshrl.u32 %v463, 7
        %v465 = vsub.s32 %v462, %v464
        %v466 = vrot.slane %v458, %v465
        %v468 = vunpack.c.l.s4 1983009808
        %v469 = vunpack.c.0.s8 %v468
        %v470 = vlaneseq
        %v471 = vshrl.u32 %v470, 7
        %v472 = vsub.s32 %v469, %v471
        %v473 = vrot.slane %v459, %v472
        %v474 = vcombine.low %v450, %v466
        %v475 = vcombine.high %v450, %v466
        %v477 = vunpack.c.l.s4 1934713408
        %v478 = vunpack.c.0.s8 %v477
        %v479 = vlaneseq
        %v480 = vshrl.u32 %v479, 7
        %v481 = vsub.s32 %v478, %v480
        %v482 = vrot.slane %v474, %v481
        %v484 = vunpack.c.l.s4 1934713408
        %v485 = vunpack.c.0.s8 %v484
        %v486 = vlaneseq
        %v487 = vshrl.u32 %v486, 7
        %v488 = vsub.s32 %v485, %v487
        %v489 = vrot.slane %v475, %v488
        %v490 = vcombine.low %v457, %v473
        %v491 = vcombine.high %v457, %v473
        %v493 = vunpack.c.l.s4 1934713408
        %v494 = vunpack.c.0.s8 %v493
        %v495 = vlaneseq
        %v496 = vshrl.u32 %v495, 7
        %v497 = vsub.s32 %v494, %v496
        %v498 = vrot.slane %v490, %v497
        %v500 = vunpack.c.l.s4 1934713408
        %v501 = vunpack.c.0.s8 %v500
        %v502 = vlaneseq
        %v503 = vshrl.u32 %v502, 7
        %v504 = vsub.s32 %v501, %v503
        %v505 = vrot.slane %v491, %v504
        %v506 = vcombine.high %v482, 0.0
        %v507 = vcombine.high %v489, 0.0
        %v508 = vcombine.high %v498, 0.0
        %v509 = vcombine.high %v505, 0.0
        %v510 = vcombine.low %v421, %v429
        %v511 = vcombine.high %v421, %v429
        %v513 = vunpack.c.l.s4 1983009808
        %v514 = vunpack.c.0.s8 %v513
        %v515 = vlaneseq
        %v516 = vshrl.u32 %v515, 7
        %v517 = vsub.s32 %v514, %v516
        %v518 = vrot.slane %v510, %v517
        %v520 = vunpack.c.l.s4 1983009808
        %v521 = vunpack.c.0.s8 %v520
        %v522 = vlaneseq
        %v523 = vshrl.u32 %v522, 7
        %v524 = vsub.s32 %v521, %v523
        %v525 = vrot.slane %v511, %v524
        %v526 = vcombine.low %v425, %v433
        %v527 = vcombine.high %v425, %v433
        %v529 = vunpack.c.l.s4 1983009808
        %v530 = vunpack.c.0.s8 %v529
        %v531 = vlaneseq
        %v532 = vshrl.u32 %v531, 7
        %v533 = vsub.s32 %v530, %v532
        %v534 = vrot.slane %v526, %v533
        %v536 = vunpack.c.l.s4 1983009808
        %v537 = vunpack.c.0.s8 %v536
        %v538 = vlaneseq
        %v539 = vshrl.u32 %v538, 7
        %v540 = vsub.s32 %v537, %v539
        %v541 = vrot.slane %v527, %v540
        %v542 = vcombine.low %v518, %v534
        %v543 = vcombine.high %v518, %v534
        %v545 = vunpack.c.l.s4 1934713408
        %v546 = vunpack.c.0.s8 %v545
        %v547 = vlaneseq
        %v548 = vshrl.u32 %v547, 7
        %v549 = vsub.s32 %v546, %v548
        %v550 = vrot.slane %v542, %v549
        %v552 = vunpack.c.l.s4 1934713408
        %v553 = vunpack.c.0.s8 %v552
        %v554 = vlaneseq
        %v555 = vshrl.u32 %v554, 7
        %v556 = vsub.s32 %v553, %v555
        %v557 = vrot.slane %v543, %v556
        %v558 = vcombine.low %v525, %v541
        %v559 = vcombine.high %v525, %v541
        %v561 = vunpack.c.l.s4 1934713408
        %v562 = vunpack.c.0.s8 %v561
        %v563 = vlaneseq
        %v564 = vshrl.u32 %v563, 7
        %v565 = vsub.s32 %v562, %v564
        %v566 = vrot.slane %v558, %v565
        %v568 = vunpack.c.l.s4 1934713408
        %v569 = vunpack.c.0.s8 %v568
        %v570 = vlaneseq
        %v571 = vshrl.u32 %v570, 7
        %v572 = vsub.s32 %v569, %v571
        %v573 = vrot.slane %v559, %v572
        %v574 = vcombine.high %v550, 0.0
        %v575 = vcombine.high %v557, 0.0
        %v576 = vcombine.high %v566, 0.0
        %v577 = vcombine.high %v573, 0.0
        %579 = vrot.lane.b32.xlu0 %v506, 16
        %v580 = vpop.permute.xlu0 %579
        %583 = vrot.lane.b32.xlu0 %v489, 32
        %v584 = vpop.permute.xlu0 %583
        %587 = vrot.lane.b32.xlu0 %v507, 48
        %v588 = vpop.permute.xlu0 %587
        %591 = vrot.lane.b32.xlu0 %v498, 64
        %v592 = vpop.permute.xlu0 %591
        %595 = vrot.lane.b32.xlu0 %v508, 80
        %v596 = vpop.permute.xlu0 %595
        %599 = vrot.lane.b32.xlu0 %v505, 96
        %v600 = vpop.permute.xlu0 %599
        %603 = vrot.lane.b32.xlu0 %v509, 112
        %v604 = vpop.permute.xlu0 %603
        %607 = vrot.lane.b32.xlu0 %v574, 16
        %v608 = vpop.permute.xlu0 %607
        %611 = vrot.lane.b32.xlu0 %v557, 32
        %v612 = vpop.permute.xlu0 %611
        %615 = vrot.lane.b32.xlu0 %v575, 48
        %v616 = vpop.permute.xlu0 %615
        %619 = vrot.lane.b32.xlu0 %v566, 64
        %v620 = vpop.permute.xlu0 %619
        %623 = vrot.lane.b32.xlu0 %v576, 80
        %v624 = vpop.permute.xlu0 %623
        %627 = vrot.lane.b32.xlu0 %v573, 96
        %v628 = vpop.permute.xlu0 %627
        %631 = vrot.lane.b32.xlu0 %v577, 112
        %v632 = vpop.permute.xlu0 %631
        %v634 = vsel %vm387, %v482, %v580
        %v635 = vsel %vm389, %v634, %v584
        %v636 = vsel %vm391, %v635, %v588
        %v637 = vsel %vm393, %v636, %v592
        %v638 = vsel %vm395, %v637, %v596
        %v639 = vsel %vm397, %v638, %v600
        %v640 = vsel %vm399, %v639, %v604
        %v641 = vsel %vm387, %v550, %v608
        %v642 = vsel %vm389, %v641, %v612
        %v643 = vsel %vm391, %v642, %v616
        %v644 = vsel %vm393, %v643, %v620
        %v645 = vsel %vm395, %v644, %v624
        %v646 = vsel %vm397, %v645, %v628
        %v647 = vsel %vm399, %v646, %v632
        %vm648 = vcmask 31744
        %v650 = vsel %vm648, %v409, 0
        %vm652 = vcmask 1043456
        %v654 = vsel %vm652, %v640, 0
        %v657 = vsel %vm652, %v647, 0
        %659 = vmatprep.subr.mxu0 %v657
        %660 = vmatpush1.msra.mxu0 %v654
        %661 = vmatprep.subr.mxu0 0.0
        %662 = vmatpush1.msra.mxu0 0.0
        %663 = vmatprep.subr.mxu0 0.0
        %664 = vmatpush1.msra.mxu0 0.0
        %665 = vmatprep.subr.mxu0 0.0
        %666 = vmatpush1.msra.mxu0 0.0
        %667 = vmatprep.subr.mxu0 0.0
        %668 = vmatpush1.msra.mxu0 0.0
        %669 = vmatprep.subr.mxu0 0.0
        %670 = vmatpush1.msra.mxu0 0.0
        %671 = vmatprep.subr.mxu0 0.0
        %672 = vmatpush1.msra.mxu0 0.0
        %673 = vmatprep.subr.mxu0 0.0
        %674 = vmatpush1.msra.mxu0 0.0
        %675 = vmatprep.subr.mxu0 0.0
        %676 = vmatpush1.msra.mxu0 0.0
        %677 = vmatprep.subr.mxu0 0.0
        %678 = vmatpush1.msra.mxu0 0.0
        %679 = vmatprep.subr.mxu0 0.0
        %680 = vmatpush1.msra.mxu0 0.0
        %681 = vmatprep.subr.mxu0 0.0
        %682 = vmatpush1.msra.mxu0 0.0
        %683 = vmatprep.subr.mxu0 0.0
        %684 = vmatpush1.msra.mxu0 0.0
        %685 = vmatprep.subr.mxu0 0.0
        %686 = vmatpush1.msra.mxu0 0.0
        %687 = vmatprep.subr.mxu0 0.0
        %688 = vmatpush1.msra.mxu0 0.0
        %689 = vmatprep.subr.mxu0 0.0
        %690 = vmatpush1.msra.mxu0 0.0
        %691 = vmatprep.subr.mxu0 0.0
        %692 = vmatpush1.msra.mxu0 0.0
        %693 = vmatprep.subr.mxu0 0.0
        %694 = vmatpush1.msra.mxu0 0.0
        %695 = vmatprep.subr.mxu0 0.0
        %696 = vmatpush1.msra.mxu0 0.0
        %697 = vmatprep.subr.mxu0 0.0
        %698 = vmatpush1.msra.mxu0 0.0
        %699 = vmatprep.subr.mxu0 0.0
        %700 = vmatpush1.msra.mxu0 0.0
        %701 = vmatprep.subr.mxu0 0.0
        %702 = vmatpush1.msra.mxu0 0.0
        %703 = vmatprep.subr.mxu0 0.0
        %704 = vmatpush1.msra.mxu0 0.0
        %705 = vmatprep.subr.mxu0 0.0
        %706 = vmatpush1.msra.mxu0 0.0
        %707 = vmatprep.subr.mxu0 0.0
        %708 = vmatpush1.msra.mxu0 0.0
        %709 = vmatprep.subr.mxu0 0.0
        %710 = vmatpush1.msra.mxu0 0.0
        %711 = vmatprep.subr.mxu0 0.0
        %712 = vmatpush1.msra.mxu0 0.0
        %713 = vmatprep.subr.mxu0 0.0
        %714 = vmatpush1.msra.mxu0 0.0
        %715 = vmatprep.subr.mxu0 0.0
        %716 = vmatpush1.msra.mxu0 0.0
        %717 = vmatprep.subr.mxu0 0.0
        %718 = vmatpush1.msra.mxu0 0.0
        %719 = vmatprep.subr.mxu0 0.0
        %720 = vmatpush1.msra.mxu0 0.0
        %721 = vmatprep.subr.mxu0 0.0
        %722 = vmatpush1.msra.mxu0 0.0
        %723 = vmatprep.mubr.f32.mxu0 0.0
        %724 = vmatmul.mubr.f32.gmra.mrb[0].mxu0 %v650
        %v725 = vpop.f32.mrb[0].mxu0
        %v726 = vadd.f32 0.0, %v725
        %v727 = vpop.f32.mrb[0].mxu0
        %v728 = vadd.f32 0.0, %v727
        %729 = vdwg.mxu0
        %v731 = vsel %vm648, %v194, 0
        %v734 = vsel %vm652, %v400, 0
        %v737 = vsel %vm652, %v407, 0
        %739 = vmatprep.subr.mxu0 %v737
        %740 = vmatpush1.msra.mxu0 %v734
        %741 = vmatprep.subr.mxu0 0.0
        %742 = vmatpush1.msra.mxu0 0.0
        %743 = vmatprep.subr.mxu0 0.0
        %744 = vmatpush1.msra.mxu0 0.0
        %745 = vmatprep.subr.mxu0 0.0
        %746 = vmatpush1.msra.mxu0 0.0
        %747 = vmatprep.subr.mxu0 0.0
        %748 = vmatpush1.msra.mxu0 0.0
        %749 = vmatprep.subr.mxu0 0.0
        %750 = vmatpush1.msra.mxu0 0.0
        %751 = vmatprep.subr.mxu0 0.0
        %752 = vmatpush1.msra.mxu0 0.0
        %753 = vmatprep.subr.mxu0 0.0
        %754 = vmatpush1.msra.mxu0 0.0
        %755 = vmatprep.subr.mxu0 0.0
        %756 = vmatpush1.msra.mxu0 0.0
        %757 = vmatprep.subr.mxu0 0.0
        %758 = vmatpush1.msra.mxu0 0.0
        %759 = vmatprep.subr.mxu0 0.0
        %760 = vmatpush1.msra.mxu0 0.0
        %761 = vmatprep.subr.mxu0 0.0
        %762 = vmatpush1.msra.mxu0 0.0
        %763 = vmatprep.subr.mxu0 0.0
        %764 = vmatpush1.msra.mxu0 0.0
        %765 = vmatprep.subr.mxu0 0.0
        %766 = vmatpush1.msra.mxu0 0.0
        %767 = vmatprep.subr.mxu0 0.0
        %768 = vmatpush1.msra.mxu0 0.0
        %769 = vmatprep.subr.mxu0 0.0
        %770 = vmatpush1.msra.mxu0 0.0
        %771 = vmatprep.subr.mxu0 0.0
        %772 = vmatpush1.msra.mxu0 0.0
        %773 = vmatprep.subr.mxu0 0.0
        %774 = vmatpush1.msra.mxu0 0.0
        %775 = vmatprep.subr.mxu0 0.0
        %776 = vmatpush1.msra.mxu0 0.0
        %777 = vmatprep.subr.mxu0 0.0
        %778 = vmatpush1.msra.mxu0 0.0
        %779 = vmatprep.subr.mxu0 0.0
        %780 = vmatpush1.msra.mxu0 0.0
        %781 = vmatprep.subr.mxu0 0.0
        %782 = vmatpush1.msra.mxu0 0.0
        %783 = vmatprep.subr.mxu0 0.0
        %784 = vmatpush1.msra.mxu0 0.0
        %785 = vmatprep.subr.mxu0 0.0
        %786 = vmatpush1.msra.mxu0 0.0
        %787 = vmatprep.subr.mxu0 0.0
        %788 = vmatpush1.msra.mxu0 0.0
        %789 = vmatprep.subr.mxu0 0.0
        %790 = vmatpush1.msra.mxu0 0.0
        %791 = vmatprep.subr.mxu0 0.0
        %792 = vmatpush1.msra.mxu0 0.0
        %793 = vmatprep.subr.mxu0 0.0
        %794 = vmatpush1.msra.mxu0 0.0
        %795 = vmatprep.subr.mxu0 0.0
        %796 = vmatpush1.msra.mxu0 0.0
        %797 = vmatprep.subr.mxu0 0.0
        %798 = vmatpush1.msra.mxu0 0.0
        %799 = vmatprep.subr.mxu0 0.0
        %800 = vmatpush1.msra.mxu0 0.0
        %801 = vmatprep.subr.mxu0 0.0
        %802 = vmatpush1.msra.mxu0 0.0
        %803 = vmatprep.mubr.f32.mxu0 0.0
        %804 = vmatmul.mubr.f32.gmra.mrb[0].mxu0 %v731
        %v805 = vpop.f32.mrb[0].mxu0
        %v806 = vadd.f32 %v726, %v805
        %v807 = vpop.f32.mrb[0].mxu0
        %v808 = vadd.f32 %v728, %v807
        %809 = vdwg.mxu0
        %v810 = vld [vmem:[%s185] sm:$0xff]
        %v811 = vld [vmem:[%s185 + $0x8] sm:$0xff]
        %v812 = vld [vmem:[%s185 + $0x18] sm:$0xff]
        %v813 = vld [vmem:[%s185 + $0x20] sm:$0xff]
        %v814 = vld [vmem:[%s185 + $0x30] sm:$0xff]
        %v815 = vld [vmem:[%s185 + $0x38] sm:$0xff]
        %v816 = vld [vmem:[%s185 + $0x48] sm:$0xff]
        %v817 = vld [vmem:[%s185 + $0x50] sm:$0xff]
        %s818 = scalar_lea.vmem %s1, 16
        %v819 = vld [vmem:[%s818] sm:$0xff]
        %828 = vrot.lane.b32.xlu0 %v810, 126
        %v829 = vpop.permute.xlu0 %828
        %830 = vrot.lane.b32.xlu0 %v811, 126
        %v831 = vpop.permute.xlu0 %830
        %832 = vrot.lane.b32.xlu0 %v812, 126
        %v833 = vpop.permute.xlu0 %832
        %834 = vrot.lane.b32.xlu0 %v813, 126
        %v835 = vpop.permute.xlu0 %834
        %836 = vrot.lane.b32.xlu0 %v814, 126
        %v837 = vpop.permute.xlu0 %836
        %838 = vrot.lane.b32.xlu0 %v815, 126
        %v839 = vpop.permute.xlu0 %838
        %840 = vrot.lane.b32.xlu0 %v816, 126
        %v841 = vpop.permute.xlu0 %840
        %842 = vrot.lane.b32.xlu0 %v817, 126
        %v843 = vpop.permute.xlu0 %842
        %v852 = vcombine.low %v829, %v837
        %v853 = vcombine.high %v829, %v837
        %v855 = vunpack.c.l.s4 1983009808
        %v856 = vunpack.c.0.s8 %v855
        %v857 = vlaneseq
        %v858 = vshrl.u32 %v857, 7
        %v859 = vsub.s32 %v856, %v858
        %v860 = vrot.slane %v852, %v859
        %v862 = vunpack.c.l.s4 1983009808
        %v863 = vunpack.c.0.s8 %v862
        %v864 = vlaneseq
        %v865 = vshrl.u32 %v864, 7
        %v866 = vsub.s32 %v863, %v865
        %v867 = vrot.slane %v853, %v866
        %v868 = vcombine.low %v833, %v841
        %v869 = vcombine.high %v833, %v841
        %v871 = vunpack.c.l.s4 1983009808
        %v872 = vunpack.c.0.s8 %v871
        %v873 = vlaneseq
        %v874 = vshrl.u32 %v873, 7
        %v875 = vsub.s32 %v872, %v874
        %v876 = vrot.slane %v868, %v875
        %v878 = vunpack.c.l.s4 1983009808
        %v879 = vunpack.c.0.s8 %v878
        %v880 = vlaneseq
        %v881 = vshrl.u32 %v880, 7
        %v882 = vsub.s32 %v879, %v881
        %v883 = vrot.slane %v869, %v882
        %v884 = vcombine.low %v860, %v876
        %v885 = vcombine.high %v860, %v876
        %v887 = vunpack.c.l.s4 1934713408
        %v888 = vunpack.c.0.s8 %v887
        %v889 = vlaneseq
        %v890 = vshrl.u32 %v889, 7
        %v891 = vsub.s32 %v888, %v890
        %v892 = vrot.slane %v884, %v891
        %v894 = vunpack.c.l.s4 1934713408
        %v895 = vunpack.c.0.s8 %v894
        %v896 = vlaneseq
        %v897 = vshrl.u32 %v896, 7
        %v898 = vsub.s32 %v895, %v897
        %v899 = vrot.slane %v885, %v898
        %v900 = vcombine.low %v867, %v883
        %v901 = vcombine.high %v867, %v883
        %v903 = vunpack.c.l.s4 1934713408
        %v904 = vunpack.c.0.s8 %v903
        %v905 = vlaneseq
        %v906 = vshrl.u32 %v905, 7
        %v907 = vsub.s32 %v904, %v906
        %v908 = vrot.slane %v900, %v907
        %v910 = vunpack.c.l.s4 1934713408
        %v911 = vunpack.c.0.s8 %v910
        %v912 = vlaneseq
        %v913 = vshrl.u32 %v912, 7
        %v914 = vsub.s32 %v911, %v913
        %v915 = vrot.slane %v901, %v914
        %v916 = vcombine.high %v892, 0.0
        %v917 = vcombine.high %v899, 0.0
        %v918 = vcombine.high %v908, 0.0
        %v919 = vcombine.high %v915, 0.0
        %v920 = vcombine.low %v831, %v839
        %v921 = vcombine.high %v831, %v839
        %v923 = vunpack.c.l.s4 1983009808
        %v924 = vunpack.c.0.s8 %v923
        %v925 = vlaneseq
        %v926 = vshrl.u32 %v925, 7
        %v927 = vsub.s32 %v924, %v926
        %v928 = vrot.slane %v920, %v927
        %v930 = vunpack.c.l.s4 1983009808
        %v931 = vunpack.c.0.s8 %v930
        %v932 = vlaneseq
        %v933 = vshrl.u32 %v932, 7
        %v934 = vsub.s32 %v931, %v933
        %v935 = vrot.slane %v921, %v934
        %v936 = vcombine.low %v835, %v843
        %v937 = vcombine.high %v835, %v843
        %v939 = vunpack.c.l.s4 1983009808
        %v940 = vunpack.c.0.s8 %v939
        %v941 = vlaneseq
        %v942 = vshrl.u32 %v941, 7
        %v943 = vsub.s32 %v940, %v942
        %v944 = vrot.slane %v936, %v943
        %v946 = vunpack.c.l.s4 1983009808
        %v947 = vunpack.c.0.s8 %v946
        %v948 = vlaneseq
        %v949 = vshrl.u32 %v948, 7
        %v950 = vsub.s32 %v947, %v949
        %v951 = vrot.slane %v937, %v950
        %v952 = vcombine.low %v928, %v944
        %v953 = vcombine.high %v928, %v944
        %v955 = vunpack.c.l.s4 1934713408
        %v956 = vunpack.c.0.s8 %v955
        %v957 = vlaneseq
        %v958 = vshrl.u32 %v957, 7
        %v959 = vsub.s32 %v956, %v958
        %v960 = vrot.slane %v952, %v959
        %v962 = vunpack.c.l.s4 1934713408
        %v963 = vunpack.c.0.s8 %v962
        %v964 = vlaneseq
        %v965 = vshrl.u32 %v964, 7
        %v966 = vsub.s32 %v963, %v965
        %v967 = vrot.slane %v953, %v966
        %v968 = vcombine.low %v935, %v951
        %v969 = vcombine.high %v935, %v951
        %v971 = vunpack.c.l.s4 1934713408
        %v972 = vunpack.c.0.s8 %v971
        %v973 = vlaneseq
        %v974 = vshrl.u32 %v973, 7
        %v975 = vsub.s32 %v972, %v974
        %v976 = vrot.slane %v968, %v975
        %v978 = vunpack.c.l.s4 1934713408
        %v979 = vunpack.c.0.s8 %v978
        %v980 = vlaneseq
        %v981 = vshrl.u32 %v980, 7
        %v982 = vsub.s32 %v979, %v981
        %v983 = vrot.slane %v969, %v982
        %v984 = vcombine.high %v960, 0.0
        %v985 = vcombine.high %v967, 0.0
        %v986 = vcombine.high %v976, 0.0
        %v987 = vcombine.high %v983, 0.0
        %989 = vrot.lane.b32.xlu0 %v916, 16
        %v990 = vpop.permute.xlu0 %989
        %993 = vrot.lane.b32.xlu0 %v899, 32
        %v994 = vpop.permute.xlu0 %993
        %997 = vrot.lane.b32.xlu0 %v917, 48
        %v998 = vpop.permute.xlu0 %997
        %1001 = vrot.lane.b32.xlu0 %v908, 64
        %v1002 = vpop.permute.xlu0 %1001
        %1005 = vrot.lane.b32.xlu0 %v918, 80
        %v1006 = vpop.permute.xlu0 %1005
        %1009 = vrot.lane.b32.xlu0 %v915, 96
        %v1010 = vpop.permute.xlu0 %1009
        %1013 = vrot.lane.b32.xlu0 %v919, 112
        %v1014 = vpop.permute.xlu0 %1013
        %1017 = vrot.lane.b32.xlu0 %v984, 16
        %v1018 = vpop.permute.xlu0 %1017
        %1021 = vrot.lane.b32.xlu0 %v967, 32
        %v1022 = vpop.permute.xlu0 %1021
        %1025 = vrot.lane.b32.xlu0 %v985, 48
        %v1026 = vpop.permute.xlu0 %1025
        %1029 = vrot.lane.b32.xlu0 %v976, 64
        %v1030 = vpop.permute.xlu0 %1029
        %1033 = vrot.lane.b32.xlu0 %v986, 80
        %v1034 = vpop.permute.xlu0 %1033
        %1037 = vrot.lane.b32.xlu0 %v983, 96
        %v1038 = vpop.permute.xlu0 %1037
        %1041 = vrot.lane.b32.xlu0 %v987, 112
        %v1042 = vpop.permute.xlu0 %1041
        %v1044 = vsel %vm387, %v892, %v990
        %v1045 = vsel %vm389, %v1044, %v994
        %v1046 = vsel %vm391, %v1045, %v998
        %v1047 = vsel %vm393, %v1046, %v1002
        %v1048 = vsel %vm395, %v1047, %v1006
        %v1049 = vsel %vm397, %v1048, %v1010
        %v1050 = vsel %vm399, %v1049, %v1014
        %v1051 = vsel %vm387, %v960, %v1018
        %v1052 = vsel %vm389, %v1051, %v1022
        %v1053 = vsel %vm391, %v1052, %v1026
        %v1054 = vsel %vm393, %v1053, %v1030
        %v1055 = vsel %vm395, %v1054, %v1034
        %v1056 = vsel %vm397, %v1055, %v1038
        %v1057 = vsel %vm399, %v1056, %v1042
        %v1059 = vsel %vm648, %v819, 0
        %v1062 = vsel %vm652, %v1050, 0
        %v1065 = vsel %vm652, %v1057, 0
        %1067 = vmatprep.subr.mxu0 %v1065
        %1068 = vmatpush1.msra.mxu0 %v1062
        %1069 = vmatprep.subr.mxu0 0.0
        %1070 = vmatpush1.msra.mxu0 0.0
        %1071 = vmatprep.subr.mxu0 0.0
        %1072 = vmatpush1.msra.mxu0 0.0
        %1073 = vmatprep.subr.mxu0 0.0
        %1074 = vmatpush1.msra.mxu0 0.0
        %1075 = vmatprep.subr.mxu0 0.0
        %1076 = vmatpush1.msra.mxu0 0.0
        %1077 = vmatprep.subr.mxu0 0.0
        %1078 = vmatpush1.msra.mxu0 0.0
        %1079 = vmatprep.subr.mxu0 0.0
        %1080 = vmatpush1.msra.mxu0 0.0
        %1081 = vmatprep.subr.mxu0 0.0
        %1082 = vmatpush1.msra.mxu0 0.0
        %1083 = vmatprep.subr.mxu0 0.0
        %1084 = vmatpush1.msra.mxu0 0.0
        %1085 = vmatprep.subr.mxu0 0.0
        %1086 = vmatpush1.msra.mxu0 0.0
        %1087 = vmatprep.subr.mxu0 0.0
        %1088 = vmatpush1.msra.mxu0 0.0
        %1089 = vmatprep.subr.mxu0 0.0
        %1090 = vmatpush1.msra.mxu0 0.0
        %1091 = vmatprep.subr.mxu0 0.0
        %1092 = vmatpush1.msra.mxu0 0.0
        %1093 = vmatprep.subr.mxu0 0.0
        %1094 = vmatpush1.msra.mxu0 0.0
        %1095 = vmatprep.subr.mxu0 0.0
        %1096 = vmatpush1.msra.mxu0 0.0
        %1097 = vmatprep.subr.mxu0 0.0
        %1098 = vmatpush1.msra.mxu0 0.0
        %1099 = vmatprep.subr.mxu0 0.0
        %1100 = vmatpush1.msra.mxu0 0.0
        %1101 = vmatprep.subr.mxu0 0.0
        %1102 = vmatpush1.msra.mxu0 0.0
        %1103 = vmatprep.subr.mxu0 0.0
        %1104 = vmatpush1.msra.mxu0 0.0
        %1105 = vmatprep.subr.mxu0 0.0
        %1106 = vmatpush1.msra.mxu0 0.0
        %1107 = vmatprep.subr.mxu0 0.0
        %1108 = vmatpush1.msra.mxu0 0.0
        %1109 = vmatprep.subr.mxu0 0.0
        %1110 = vmatpush1.msra.mxu0 0.0
        %1111 = vmatprep.subr.mxu0 0.0
        %1112 = vmatpush1.msra.mxu0 0.0
        %1113 = vmatprep.subr.mxu0 0.0
        %1114 = vmatpush1.msra.mxu0 0.0
        %1115 = vmatprep.subr.mxu0 0.0
        %1116 = vmatpush1.msra.mxu0 0.0
        %1117 = vmatprep.subr.mxu0 0.0
        %1118 = vmatpush1.msra.mxu0 0.0
        %1119 = vmatprep.subr.mxu0 0.0
        %1120 = vmatpush1.msra.mxu0 0.0
        %1121 = vmatprep.subr.mxu0 0.0
        %1122 = vmatpush1.msra.mxu0 0.0
        %1123 = vmatprep.subr.mxu0 0.0
        %1124 = vmatpush1.msra.mxu0 0.0
        %1125 = vmatprep.subr.mxu0 0.0
        %1126 = vmatpush1.msra.mxu0 0.0
        %1127 = vmatprep.subr.mxu0 0.0
        %1128 = vmatpush1.msra.mxu0 0.0
        %1129 = vmatprep.subr.mxu0 0.0
        %1130 = vmatpush1.msra.mxu0 0.0
        %1131 = vmatprep.mubr.f32.mxu0 0.0
        %1132 = vmatmul.mubr.f32.gmra.mrb[0].mxu0 %v1059
        %v1133 = vpop.f32.mrb[0].mxu0
        %v1134 = vadd.f32 0.0, %v1133
        %v1135 = vpop.f32.mrb[0].mxu0
        %v1136 = vadd.f32 0.0, %v1135
        %1137 = vdwg.mxu0
        %v1138 = vadd.f32 %v806, %v1134
        %v1139 = vadd.f32 %v808, %v1136
        %s1140 = sadd.s32 %s184, 1
        %s1141 = scalar_lea.vmem %s182, %s1140
        %v1142 = vld [vmem:[%s1141] sm:$0xff]
        %v1143 = vld [vmem:[%s1141 + $0x8] sm:$0xff]
        %v1144 = vld [vmem:[%s1141 + $0x18] sm:$0xff]
        %v1145 = vld [vmem:[%s1141 + $0x20] sm:$0xff]
        %v1146 = vld [vmem:[%s1141 + $0x30] sm:$0xff]
        %v1147 = vld [vmem:[%s1141 + $0x38] sm:$0xff]
        %v1148 = vld [vmem:[%s1141 + $0x48] sm:$0xff]
        %v1149 = vld [vmem:[%s1141 + $0x50] sm:$0xff]
        %s1150 = scalar_lea.vmem %s1, 24
        %v1151 = vld [vmem:[%s1150] sm:$0xff]
        %v1152 = vcombine.low %v1142, %v1146
        %v1153 = vcombine.high %v1142, %v1146
        %v1155 = vunpack.c.l.s4 1983009808
        %v1156 = vunpack.c.0.s8 %v1155
        %v1157 = vlaneseq
        %v1158 = vshrl.u32 %v1157, 7
        %v1159 = vsub.s32 %v1156, %v1158
        %v1160 = vrot.slane %v1152, %v1159
        %v1162 = vunpack.c.l.s4 1983009808
        %v1163 = vunpack.c.0.s8 %v1162
        %v1164 = vlaneseq
        %v1165 = vshrl.u32 %v1164, 7
        %v1166 = vsub.s32 %v1163, %v1165
        %v1167 = vrot.slane %v1153, %v1166
        %v1168 = vcombine.low %v1144, %v1148
        %v1169 = vcombine.high %v1144, %v1148
        %v1171 = vunpack.c.l.s4 1983009808
        %v1172 = vunpack.c.0.s8 %v1171
        %v1173 = vlaneseq
        %v1174 = vshrl.u32 %v1173, 7
        %v1175 = vsub.s32 %v1172, %v1174
        %v1176 = vrot.slane %v1168, %v1175
        %v1178 = vunpack.c.l.s4 1983009808
        %v1179 = vunpack.c.0.s8 %v1178
        %v1180 = vlaneseq
        %v1181 = vshrl.u32 %v1180, 7
        %v1182 = vsub.s32 %v1179, %v1181
        %v1183 = vrot.slane %v1169, %v1182
        %v1184 = vcombine.low %v1160, %v1176
        %v1185 = vcombine.high %v1160, %v1176
        %v1187 = vunpack.c.l.s4 1934713408
        %v1188 = vunpack.c.0.s8 %v1187
        %v1189 = vlaneseq
        %v1190 = vshrl.u32 %v1189, 7
        %v1191 = vsub.s32 %v1188, %v1190
        %v1192 = vrot.slane %v1184, %v1191
        %v1194 = vunpack.c.l.s4 1934713408
        %v1195 = vunpack.c.0.s8 %v1194
        %v1196 = vlaneseq
        %v1197 = vshrl.u32 %v1196, 7
        %v1198 = vsub.s32 %v1195, %v1197
        %v1199 = vrot.slane %v1185, %v1198
        %v1200 = vcombine.low %v1167, %v1183
        %v1201 = vcombine.high %v1167, %v1183
        %v1203 = vunpack.c.l.s4 1934713408
        %v1204 = vunpack.c.0.s8 %v1203
        %v1205 = vlaneseq
        %v1206 = vshrl.u32 %v1205, 7
        %v1207 = vsub.s32 %v1204, %v1206
        %v1208 = vrot.slane %v1200, %v1207
        %v1210 = vunpack.c.l.s4 1934713408
        %v1211 = vunpack.c.0.s8 %v1210
        %v1212 = vlaneseq
        %v1213 = vshrl.u32 %v1212, 7
        %v1214 = vsub.s32 %v1211, %v1213
        %v1215 = vrot.slane %v1201, %v1214
        %v1216 = vcombine.high %v1192, 0.0
        %v1217 = vcombine.high %v1199, 0.0
        %v1218 = vcombine.high %v1208, 0.0
        %v1219 = vcombine.high %v1215, 0.0
        %v1220 = vcombine.low %v1143, %v1147
        %v1221 = vcombine.high %v1143, %v1147
        %v1223 = vunpack.c.l.s4 1983009808
        %v1224 = vunpack.c.0.s8 %v1223
        %v1225 = vlaneseq
        %v1226 = vshrl.u32 %v1225, 7
        %v1227 = vsub.s32 %v1224, %v1226
        %v1228 = vrot.slane %v1220, %v1227
        %v1230 = vunpack.c.l.s4 1983009808
        %v1231 = vunpack.c.0.s8 %v1230
        %v1232 = vlaneseq
        %v1233 = vshrl.u32 %v1232, 7
        %v1234 = vsub.s32 %v1231, %v1233
        %v1235 = vrot.slane %v1221, %v1234
        %v1236 = vcombine.low %v1145, %v1149
        %v1237 = vcombine.high %v1145, %v1149
        %v1239 = vunpack.c.l.s4 1983009808
        %v1240 = vunpack.c.0.s8 %v1239
        %v1241 = vlaneseq
        %v1242 = vshrl.u32 %v1241, 7
        %v1243 = vsub.s32 %v1240, %v1242
        %v1244 = vrot.slane %v1236, %v1243
        %v1246 = vunpack.c.l.s4 1983009808
        %v1247 = vunpack.c.0.s8 %v1246
        %v1248 = vlaneseq
        %v1249 = vshrl.u32 %v1248, 7
        %v1250 = vsub.s32 %v1247, %v1249
        %v1251 = vrot.slane %v1237, %v1250
        %v1252 = vcombine.low %v1228, %v1244
        %v1253 = vcombine.high %v1228, %v1244
        %v1255 = vunpack.c.l.s4 1934713408
        %v1256 = vunpack.c.0.s8 %v1255
        %v1257 = vlaneseq
        %v1258 = vshrl.u32 %v1257, 7
        %v1259 = vsub.s32 %v1256, %v1258
        %v1260 = vrot.slane %v1252, %v1259
        %v1262 = vunpack.c.l.s4 1934713408
        %v1263 = vunpack.c.0.s8 %v1262
        %v1264 = vlaneseq
        %v1265 = vshrl.u32 %v1264, 7
        %v1266 = vsub.s32 %v1263, %v1265
        %v1267 = vrot.slane %v1253, %v1266
        %v1268 = vcombine.low %v1235, %v1251
        %v1269 = vcombine.high %v1235, %v1251
        %v1271 = vunpack.c.l.s4 1934713408
        %v1272 = vunpack.c.0.s8 %v1271
        %v1273 = vlaneseq
        %v1274 = vshrl.u32 %v1273, 7
        %v1275 = vsub.s32 %v1272, %v1274
        %v1276 = vrot.slane %v1268, %v1275
        %v1278 = vunpack.c.l.s4 1934713408
        %v1279 = vunpack.c.0.s8 %v1278
        %v1280 = vlaneseq
        %v1281 = vshrl.u32 %v1280, 7
        %v1282 = vsub.s32 %v1279, %v1281
        %v1283 = vrot.slane %v1269, %v1282
        %v1284 = vcombine.high %v1260, 0.0
        %v1285 = vcombine.high %v1267, 0.0
        %v1286 = vcombine.high %v1276, 0.0
        %v1287 = vcombine.high %v1283, 0.0
        %1289 = vrot.lane.b32.xlu0 %v1216, 16
        %v1290 = vpop.permute.xlu0 %1289
        %1293 = vrot.lane.b32.xlu0 %v1199, 32
        %v1294 = vpop.permute.xlu0 %1293
        %1297 = vrot.lane.b32.xlu0 %v1217, 48
        %v1298 = vpop.permute.xlu0 %1297
        %1301 = vrot.lane.b32.xlu0 %v1208, 64
        %v1302 = vpop.permute.xlu0 %1301
        %1305 = vrot.lane.b32.xlu0 %v1218, 80
        %v1306 = vpop.permute.xlu0 %1305
        %1309 = vrot.lane.b32.xlu0 %v1215, 96
        %v1310 = vpop.permute.xlu0 %1309
        %1313 = vrot.lane.b32.xlu0 %v1219, 112
        %v1314 = vpop.permute.xlu0 %1313
        %1317 = vrot.lane.b32.xlu0 %v1284, 16
        %v1318 = vpop.permute.xlu0 %1317
        %1321 = vrot.lane.b32.xlu0 %v1267, 32
        %v1322 = vpop.permute.xlu0 %1321
        %1325 = vrot.lane.b32.xlu0 %v1285, 48
        %v1326 = vpop.permute.xlu0 %1325
        %1329 = vrot.lane.b32.xlu0 %v1276, 64
        %v1330 = vpop.permute.xlu0 %1329
        %1333 = vrot.lane.b32.xlu0 %v1286, 80
        %v1334 = vpop.permute.xlu0 %1333
        %1337 = vrot.lane.b32.xlu0 %v1283, 96
        %v1338 = vpop.permute.xlu0 %1337
        %1341 = vrot.lane.b32.xlu0 %v1287, 112
        %v1342 = vpop.permute.xlu0 %1341
        %v1344 = vsel %vm387, %v1192, %v1290
        %v1345 = vsel %vm389, %v1344, %v1294
        %v1346 = vsel %vm391, %v1345, %v1298
        %v1347 = vsel %vm393, %v1346, %v1302
        %v1348 = vsel %vm395, %v1347, %v1306
        %v1349 = vsel %vm397, %v1348, %v1310
        %v1350 = vsel %vm399, %v1349, %v1314
        %v1351 = vsel %vm387, %v1260, %v1318
        %v1352 = vsel %vm389, %v1351, %v1322
        %v1353 = vsel %vm391, %v1352, %v1326
        %v1354 = vsel %vm393, %v1353, %v1330
        %v1355 = vsel %vm395, %v1354, %v1334
        %v1356 = vsel %vm397, %v1355, %v1338
        %v1357 = vsel %vm399, %v1356, %v1342
        %v1359 = vsel %vm648, %v1151, 0
        %v1362 = vsel %vm652, %v1350, 0
        %v1365 = vsel %vm652, %v1357, 0
        %1367 = vmatprep.subr.mxu0 %v1365
        %1368 = vmatpush1.msra.mxu0 %v1362
        %1369 = vmatprep.subr.mxu0 0.0
        %1370 = vmatpush1.msra.mxu0 0.0
        %1371 = vmatprep.subr.mxu0 0.0
        %1372 = vmatpush1.msra.mxu0 0.0
        %1373 = vmatprep.subr.mxu0 0.0
        %1374 = vmatpush1.msra.mxu0 0.0
        %1375 = vmatprep.subr.mxu0 0.0
        %1376 = vmatpush1.msra.mxu0 0.0
        %1377 = vmatprep.subr.mxu0 0.0
        %1378 = vmatpush1.msra.mxu0 0.0
        %1379 = vmatprep.subr.mxu0 0.0
        %1380 = vmatpush1.msra.mxu0 0.0
        %1381 = vmatprep.subr.mxu0 0.0
        %1382 = vmatpush1.msra.mxu0 0.0
        %1383 = vmatprep.subr.mxu0 0.0
        %1384 = vmatpush1.msra.mxu0 0.0
        %1385 = vmatprep.subr.mxu0 0.0
        %1386 = vmatpush1.msra.mxu0 0.0
        %1387 = vmatprep.subr.mxu0 0.0
        %1388 = vmatpush1.msra.mxu0 0.0
        %1389 = vmatprep.subr.mxu0 0.0
        %1390 = vmatpush1.msra.mxu0 0.0
        %1391 = vmatprep.subr.mxu0 0.0
        %1392 = vmatpush1.msra.mxu0 0.0
        %1393 = vmatprep.subr.mxu0 0.0
        %1394 = vmatpush1.msra.mxu0 0.0
        %1395 = vmatprep.subr.mxu0 0.0
        %1396 = vmatpush1.msra.mxu0 0.0
        %1397 = vmatprep.subr.mxu0 0.0
        %1398 = vmatpush1.msra.mxu0 0.0
        %1399 = vmatprep.subr.mxu0 0.0
        %1400 = vmatpush1.msra.mxu0 0.0
        %1401 = vmatprep.subr.mxu0 0.0
        %1402 = vmatpush1.msra.mxu0 0.0
        %1403 = vmatprep.subr.mxu0 0.0
        %1404 = vmatpush1.msra.mxu0 0.0
        %1405 = vmatprep.subr.mxu0 0.0
        %1406 = vmatpush1.msra.mxu0 0.0
        %1407 = vmatprep.subr.mxu0 0.0
        %1408 = vmatpush1.msra.mxu0 0.0
        %1409 = vmatprep.subr.mxu0 0.0
        %1410 = vmatpush1.msra.mxu0 0.0
        %1411 = vmatprep.subr.mxu0 0.0
        %1412 = vmatpush1.msra.mxu0 0.0
        %1413 = vmatprep.subr.mxu0 0.0
        %1414 = vmatpush1.msra.mxu0 0.0
        %1415 = vmatprep.subr.mxu0 0.0
        %1416 = vmatpush1.msra.mxu0 0.0
        %1417 = vmatprep.subr.mxu0 0.0
        %1418 = vmatpush1.msra.mxu0 0.0
        %1419 = vmatprep.subr.mxu0 0.0
        %1420 = vmatpush1.msra.mxu0 0.0
        %1421 = vmatprep.subr.mxu0 0.0
        %1422 = vmatpush1.msra.mxu0 0.0
        %1423 = vmatprep.subr.mxu0 0.0
        %1424 = vmatpush1.msra.mxu0 0.0
        %1425 = vmatprep.subr.mxu0 0.0
        %1426 = vmatpush1.msra.mxu0 0.0
        %1427 = vmatprep.subr.mxu0 0.0
        %1428 = vmatpush1.msra.mxu0 0.0
        %1429 = vmatprep.subr.mxu0 0.0
        %1430 = vmatpush1.msra.mxu0 0.0
        %1431 = vmatprep.mubr.f32.mxu0 0.0
        %1432 = vmatmul.mubr.f32.gmra.mrb[0].mxu0 %v1359
        %v1433 = vpop.f32.mrb[0].mxu0
        %v1434 = vadd.f32 0.0, %v1433
        %v1435 = vpop.f32.mrb[0].mxu0
        %v1436 = vadd.f32 0.0, %v1435
        %1437 = vdwg.mxu0
        %v1438 = vadd.f32 %v1138, %v1434
        %v1439 = vadd.f32 %v1139, %v1436
        %v1440 = vld [vmem:[%s1141] sm:$0xff]
        %v1441 = vld [vmem:[%s1141 + $0x8] sm:$0xff]
        %v1442 = vld [vmem:[%s1141 + $0x18] sm:$0xff]
        %v1443 = vld [vmem:[%s1141 + $0x20] sm:$0xff]
        %v1444 = vld [vmem:[%s1141 + $0x30] sm:$0xff]
        %v1445 = vld [vmem:[%s1141 + $0x38] sm:$0xff]
        %v1446 = vld [vmem:[%s1141 + $0x48] sm:$0xff]
        %v1447 = vld [vmem:[%s1141 + $0x50] sm:$0xff]
        %s1448 = scalar_lea.vmem %s1, 32
        %v1449 = vld [vmem:[%s1448] sm:$0xff]
        %1458 = vrot.lane.b32.xlu0 %v1440, 127
        %v1459 = vpop.permute.xlu0 %1458
        %1460 = vrot.lane.b32.xlu0 %v1441, 127
        %v1461 = vpop.permute.xlu0 %1460
        %1462 = vrot.lane.b32.xlu0 %v1442, 127
        %v1463 = vpop.permute.xlu0 %1462
        %1464 = vrot.lane.b32.xlu0 %v1443, 127
        %v1465 = vpop.permute.xlu0 %1464
        %1466 = vrot.lane.b32.xlu0 %v1444, 127
        %v1467 = vpop.permute.xlu0 %1466
        %1468 = vrot.lane.b32.xlu0 %v1445, 127
        %v1469 = vpop.permute.xlu0 %1468
        %1470 = vrot.lane.b32.xlu0 %v1446, 127
        %v1471 = vpop.permute.xlu0 %1470
        %1472 = vrot.lane.b32.xlu0 %v1447, 127
        %v1473 = vpop.permute.xlu0 %1472
        %v1482 = vcombine.low %v1459, %v1467
        %v1483 = vcombine.high %v1459, %v1467
        %v1485 = vunpack.c.l.s4 1983009808
        %v1486 = vunpack.c.0.s8 %v1485
        %v1487 = vlaneseq
        %v1488 = vshrl.u32 %v1487, 7
        %v1489 = vsub.s32 %v1486, %v1488
        %v1490 = vrot.slane %v1482, %v1489
        %v1492 = vunpack.c.l.s4 1983009808
        %v1493 = vunpack.c.0.s8 %v1492
        %v1494 = vlaneseq
        %v1495 = vshrl.u32 %v1494, 7
        %v1496 = vsub.s32 %v1493, %v1495
        %v1497 = vrot.slane %v1483, %v1496
        %v1498 = vcombine.low %v1463, %v1471
        %v1499 = vcombine.high %v1463, %v1471
        %v1501 = vunpack.c.l.s4 1983009808
        %v1502 = vunpack.c.0.s8 %v1501
        %v1503 = vlaneseq
        %v1504 = vshrl.u32 %v1503, 7
        %v1505 = vsub.s32 %v1502, %v1504
        %v1506 = vrot.slane %v1498, %v1505
        %v1508 = vunpack.c.l.s4 1983009808
        %v1509 = vunpack.c.0.s8 %v1508
        %v1510 = vlaneseq
        %v1511 = vshrl.u32 %v1510, 7
        %v1512 = vsub.s32 %v1509, %v1511
        %v1513 = vrot.slane %v1499, %v1512
        %v1514 = vcombine.low %v1490, %v1506
        %v1515 = vcombine.high %v1490, %v1506
        %v1517 = vunpack.c.l.s4 1934713408
        %v1518 = vunpack.c.0.s8 %v1517
        %v1519 = vlaneseq
        %v1520 = vshrl.u32 %v1519, 7
        %v1521 = vsub.s32 %v1518, %v1520
        %v1522 = vrot.slane %v1514, %v1521
        %v1524 = vunpack.c.l.s4 1934713408
        %v1525 = vunpack.c.0.s8 %v1524
        %v1526 = vlaneseq
        %v1527 = vshrl.u32 %v1526, 7
        %v1528 = vsub.s32 %v1525, %v1527
        %v1529 = vrot.slane %v1515, %v1528
        %v1530 = vcombine.low %v1497, %v1513
        %v1531 = vcombine.high %v1497, %v1513
        %v1533 = vunpack.c.l.s4 1934713408
        %v1534 = vunpack.c.0.s8 %v1533
        %v1535 = vlaneseq
        %v1536 = vshrl.u32 %v1535, 7
        %v1537 = vsub.s32 %v1534, %v1536
        %v1538 = vrot.slane %v1530, %v1537
        %v1540 = vunpack.c.l.s4 1934713408
        %v1541 = vunpack.c.0.s8 %v1540
        %v1542 = vlaneseq
        %v1543 = vshrl.u32 %v1542, 7
        %v1544 = vsub.s32 %v1541, %v1543
        %v1545 = vrot.slane %v1531, %v1544
        %v1546 = vcombine.high %v1522, 0.0
        %v1547 = vcombine.high %v1529, 0.0
        %v1548 = vcombine.high %v1538, 0.0
        %v1549 = vcombine.high %v1545, 0.0
        %v1550 = vcombine.low %v1461, %v1469
        %v1551 = vcombine.high %v1461, %v1469
        %v1553 = vunpack.c.l.s4 1983009808
        %v1554 = vunpack.c.0.s8 %v1553
        %v1555 = vlaneseq
        %v1556 = vshrl.u32 %v1555, 7
        %v1557 = vsub.s32 %v1554, %v1556
        %v1558 = vrot.slane %v1550, %v1557
        %v1560 = vunpack.c.l.s4 1983009808
        %v1561 = vunpack.c.0.s8 %v1560
        %v1562 = vlaneseq
        %v1563 = vshrl.u32 %v1562, 7
        %v1564 = vsub.s32 %v1561, %v1563
        %v1565 = vrot.slane %v1551, %v1564
        %v1566 = vcombine.low %v1465, %v1473
        %v1567 = vcombine.high %v1465, %v1473
        %v1569 = vunpack.c.l.s4 1983009808
        %v1570 = vunpack.c.0.s8 %v1569
        %v1571 = vlaneseq
        %v1572 = vshrl.u32 %v1571, 7
        %v1573 = vsub.s32 %v1570, %v1572
        %v1574 = vrot.slane %v1566, %v1573
        %v1576 = vunpack.c.l.s4 1983009808
        %v1577 = vunpack.c.0.s8 %v1576
        %v1578 = vlaneseq
        %v1579 = vshrl.u32 %v1578, 7
        %v1580 = vsub.s32 %v1577, %v1579
        %v1581 = vrot.slane %v1567, %v1580
        %v1582 = vcombine.low %v1558, %v1574
        %v1583 = vcombine.high %v1558, %v1574
        %v1585 = vunpack.c.l.s4 1934713408
        %v1586 = vunpack.c.0.s8 %v1585
        %v1587 = vlaneseq
        %v1588 = vshrl.u32 %v1587, 7
        %v1589 = vsub.s32 %v1586, %v1588
        %v1590 = vrot.slane %v1582, %v1589
        %v1592 = vunpack.c.l.s4 1934713408
        %v1593 = vunpack.c.0.s8 %v1592
        %v1594 = vlaneseq
        %v1595 = vshrl.u32 %v1594, 7
        %v1596 = vsub.s32 %v1593, %v1595
        %v1597 = vrot.slane %v1583, %v1596
        %v1598 = vcombine.low %v1565, %v1581
        %v1599 = vcombine.high %v1565, %v1581
        %v1601 = vunpack.c.l.s4 1934713408
        %v1602 = vunpack.c.0.s8 %v1601
        %v1603 = vlaneseq
        %v1604 = vshrl.u32 %v1603, 7
        %v1605 = vsub.s32 %v1602, %v1604
        %v1606 = vrot.slane %v1598, %v1605
        %v1608 = vunpack.c.l.s4 1934713408
        %v1609 = vunpack.c.0.s8 %v1608
        %v1610 = vlaneseq
        %v1611 = vshrl.u32 %v1610, 7
        %v1612 = vsub.s32 %v1609, %v1611
        %v1613 = vrot.slane %v1599, %v1612
        %v1614 = vcombine.high %v1590, 0.0
        %v1615 = vcombine.high %v1597, 0.0
        %v1616 = vcombine.high %v1606, 0.0
        %v1617 = vcombine.high %v1613, 0.0
        %1619 = vrot.lane.b32.xlu0 %v1546, 16
        %v1620 = vpop.permute.xlu0 %1619
        %1623 = vrot.lane.b32.xlu0 %v1529, 32
        %v1624 = vpop.permute.xlu0 %1623
        %1627 = vrot.lane.b32.xlu0 %v1547, 48
        %v1628 = vpop.permute.xlu0 %1627
        %1631 = vrot.lane.b32.xlu0 %v1538, 64
        %v1632 = vpop.permute.xlu0 %1631
        %1635 = vrot.lane.b32.xlu0 %v1548, 80
        %v1636 = vpop.permute.xlu0 %1635
        %1639 = vrot.lane.b32.xlu0 %v1545, 96
        %v1640 = vpop.permute.xlu0 %1639
        %1643 = vrot.lane.b32.xlu0 %v1549, 112
        %v1644 = vpop.permute.xlu0 %1643
        %1647 = vrot.lane.b32.xlu0 %v1614, 16
        %v1648 = vpop.permute.xlu0 %1647
        %1651 = vrot.lane.b32.xlu0 %v1597, 32
        %v1652 = vpop.permute.xlu0 %1651
        %1655 = vrot.lane.b32.xlu0 %v1615, 48
        %v1656 = vpop.permute.xlu0 %1655
        %1659 = vrot.lane.b32.xlu0 %v1606, 64
        %v1660 = vpop.permute.xlu0 %1659
        %1663 = vrot.lane.b32.xlu0 %v1616, 80
        %v1664 = vpop.permute.xlu0 %1663
        %1667 = vrot.lane.b32.xlu0 %v1613, 96
        %v1668 = vpop.permute.xlu0 %1667
        %1671 = vrot.lane.b32.xlu0 %v1617, 112
        %v1672 = vpop.permute.xlu0 %1671
        %v1674 = vsel %vm387, %v1522, %v1620
        %v1675 = vsel %vm389, %v1674, %v1624
        %v1676 = vsel %vm391, %v1675, %v1628
        %v1677 = vsel %vm393, %v1676, %v1632
        %v1678 = vsel %vm395, %v1677, %v1636
        %v1679 = vsel %vm397, %v1678, %v1640
        %v1680 = vsel %vm399, %v1679, %v1644
        %v1681 = vsel %vm387, %v1590, %v1648
        %v1682 = vsel %vm389, %v1681, %v1652
        %v1683 = vsel %vm391, %v1682, %v1656
        %v1684 = vsel %vm393, %v1683, %v1660
        %v1685 = vsel %vm395, %v1684, %v1664
        %v1686 = vsel %vm397, %v1685, %v1668
        %v1687 = vsel %vm399, %v1686, %v1672
        %v1689 = vsel %vm648, %v1449, 0
        %v1692 = vsel %vm652, %v1680, 0
        %v1695 = vsel %vm652, %v1687, 0
        %1697 = vmatprep.subr.mxu0 %v1695
        %1698 = vmatpush1.msra.mxu0 %v1692
        %1699 = vmatprep.subr.mxu0 0.0
        %1700 = vmatpush1.msra.mxu0 0.0
        %1701 = vmatprep.subr.mxu0 0.0
        %1702 = vmatpush1.msra.mxu0 0.0
        %1703 = vmatprep.subr.mxu0 0.0
        %1704 = vmatpush1.msra.mxu0 0.0
        %1705 = vmatprep.subr.mxu0 0.0
        %1706 = vmatpush1.msra.mxu0 0.0
        %1707 = vmatprep.subr.mxu0 0.0
        %1708 = vmatpush1.msra.mxu0 0.0
        %1709 = vmatprep.subr.mxu0 0.0
        %1710 = vmatpush1.msra.mxu0 0.0
        %1711 = vmatprep.subr.mxu0 0.0
        %1712 = vmatpush1.msra.mxu0 0.0
        %1713 = vmatprep.subr.mxu0 0.0
        %1714 = vmatpush1.msra.mxu0 0.0
        %1715 = vmatprep.subr.mxu0 0.0
        %1716 = vmatpush1.msra.mxu0 0.0
        %1717 = vmatprep.subr.mxu0 0.0
        %1718 = vmatpush1.msra.mxu0 0.0
        %1719 = vmatprep.subr.mxu0 0.0
        %1720 = vmatpush1.msra.mxu0 0.0
        %1721 = vmatprep.subr.mxu0 0.0
        %1722 = vmatpush1.msra.mxu0 0.0
        %1723 = vmatprep.subr.mxu0 0.0
        %1724 = vmatpush1.msra.mxu0 0.0
        %1725 = vmatprep.subr.mxu0 0.0
        %1726 = vmatpush1.msra.mxu0 0.0
        %1727 = vmatprep.subr.mxu0 0.0
        %1728 = vmatpush1.msra.mxu0 0.0
        %1729 = vmatprep.subr.mxu0 0.0
        %1730 = vmatpush1.msra.mxu0 0.0
        %1731 = vmatprep.subr.mxu0 0.0
        %1732 = vmatpush1.msra.mxu0 0.0
        %1733 = vmatprep.subr.mxu0 0.0
        %1734 = vmatpush1.msra.mxu0 0.0
        %1735 = vmatprep.subr.mxu0 0.0
        %1736 = vmatpush1.msra.mxu0 0.0
        %1737 = vmatprep.subr.mxu0 0.0
        %1738 = vmatpush1.msra.mxu0 0.0
        %1739 = vmatprep.subr.mxu0 0.0
        %1740 = vmatpush1.msra.mxu0 0.0
        %1741 = vmatprep.subr.mxu0 0.0
        %1742 = vmatpush1.msra.mxu0 0.0
        %1743 = vmatprep.subr.mxu0 0.0
        %1744 = vmatpush1.msra.mxu0 0.0
        %1745 = vmatprep.subr.mxu0 0.0
        %1746 = vmatpush1.msra.mxu0 0.0
        %1747 = vmatprep.subr.mxu0 0.0
        %1748 = vmatpush1.msra.mxu0 0.0
        %1749 = vmatprep.subr.mxu0 0.0
        %1750 = vmatpush1.msra.mxu0 0.0
        %1751 = vmatprep.subr.mxu0 0.0
        %1752 = vmatpush1.msra.mxu0 0.0
        %1753 = vmatprep.subr.mxu0 0.0
        %1754 = vmatpush1.msra.mxu0 0.0
        %1755 = vmatprep.subr.mxu0 0.0
        %1756 = vmatpush1.msra.mxu0 0.0
        %1757 = vmatprep.subr.mxu0 0.0
        %1758 = vmatpush1.msra.mxu0 0.0
        %1759 = vmatprep.subr.mxu0 0.0
        %1760 = vmatpush1.msra.mxu0 0.0
        %1761 = vmatprep.mubr.f32.mxu0 0.0
        %1762 = vmatmul.mubr.f32.gmra.mrb[0].mxu0 %v1689
        %v1763 = vpop.f32.mrb[0].mxu0
        %v1764 = vadd.f32 0.0, %v1763
        %v1765 = vpop.f32.mrb[0].mxu0
        %v1766 = vadd.f32 0.0, %v1765
        %1767 = vdwg.mxu0
        %v1768 = vadd.f32 %v1438, %v1764
        %v1769 = vadd.f32 %v1439, %v1766
        %v1770 = vld [vmem:[%s1141] sm:$0xff]
        %v1771 = vld [vmem:[%s1141 + $0x8] sm:$0xff]
        %v1772 = vld [vmem:[%s1141 + $0x18] sm:$0xff]
        %v1773 = vld [vmem:[%s1141 + $0x20] sm:$0xff]
        %v1774 = vld [vmem:[%s1141 + $0x30] sm:$0xff]
        %v1775 = vld [vmem:[%s1141 + $0x38] sm:$0xff]
        %v1776 = vld [vmem:[%s1141 + $0x48] sm:$0xff]
        %v1777 = vld [vmem:[%s1141 + $0x50] sm:$0xff]
        %s1778 = scalar_lea.vmem %s1, 40
        %v1779 = vld [vmem:[%s1778] sm:$0xff]
        %1788 = vrot.lane.b32.xlu0 %v1770, 126
        %v1789 = vpop.permute.xlu0 %1788
        %1790 = vrot.lane.b32.xlu0 %v1771, 126
        %v1791 = vpop.permute.xlu0 %1790
        %1792 = vrot.lane.b32.xlu0 %v1772, 126
        %v1793 = vpop.permute.xlu0 %1792
        %1794 = vrot.lane.b32.xlu0 %v1773, 126
        %v1795 = vpop.permute.xlu0 %1794
        %1796 = vrot.lane.b32.xlu0 %v1774, 126
        %v1797 = vpop.permute.xlu0 %1796
        %1798 = vrot.lane.b32.xlu0 %v1775, 126
        %v1799 = vpop.permute.xlu0 %1798
        %1800 = vrot.lane.b32.xlu0 %v1776, 126
        %v1801 = vpop.permute.xlu0 %1800
        %1802 = vrot.lane.b32.xlu0 %v1777, 126
        %v1803 = vpop.permute.xlu0 %1802
        %v1812 = vcombine.low %v1789, %v1797
        %v1813 = vcombine.high %v1789, %v1797
        %v1815 = vunpack.c.l.s4 1983009808
        %v1816 = vunpack.c.0.s8 %v1815
        %v1817 = vlaneseq
        %v1818 = vshrl.u32 %v1817, 7
        %v1819 = vsub.s32 %v1816, %v1818
        %v1820 = vrot.slane %v1812, %v1819
        %v1822 = vunpack.c.l.s4 1983009808
        %v1823 = vunpack.c.0.s8 %v1822
        %v1824 = vlaneseq
        %v1825 = vshrl.u32 %v1824, 7
        %v1826 = vsub.s32 %v1823, %v1825
        %v1827 = vrot.slane %v1813, %v1826
        %v1828 = vcombine.low %v1793, %v1801
        %v1829 = vcombine.high %v1793, %v1801
        %v1831 = vunpack.c.l.s4 1983009808
        %v1832 = vunpack.c.0.s8 %v1831
        %v1833 = vlaneseq
        %v1834 = vshrl.u32 %v1833, 7
        %v1835 = vsub.s32 %v1832, %v1834
        %v1836 = vrot.slane %v1828, %v1835
        %v1838 = vunpack.c.l.s4 1983009808
        %v1839 = vunpack.c.0.s8 %v1838
        %v1840 = vlaneseq
        %v1841 = vshrl.u32 %v1840, 7
        %v1842 = vsub.s32 %v1839, %v1841
        %v1843 = vrot.slane %v1829, %v1842
        %v1844 = vcombine.low %v1820, %v1836
        %v1845 = vcombine.high %v1820, %v1836
        %v1847 = vunpack.c.l.s4 1934713408
        %v1848 = vunpack.c.0.s8 %v1847
        %v1849 = vlaneseq
        %v1850 = vshrl.u32 %v1849, 7
        %v1851 = vsub.s32 %v1848, %v1850
        %v1852 = vrot.slane %v1844, %v1851
        %v1854 = vunpack.c.l.s4 1934713408
        %v1855 = vunpack.c.0.s8 %v1854
        %v1856 = vlaneseq
        %v1857 = vshrl.u32 %v1856, 7
        %v1858 = vsub.s32 %v1855, %v1857
        %v1859 = vrot.slane %v1845, %v1858
        %v1860 = vcombine.low %v1827, %v1843
        %v1861 = vcombine.high %v1827, %v1843
        %v1863 = vunpack.c.l.s4 1934713408
        %v1864 = vunpack.c.0.s8 %v1863
        %v1865 = vlaneseq
        %v1866 = vshrl.u32 %v1865, 7
        %v1867 = vsub.s32 %v1864, %v1866
        %v1868 = vrot.slane %v1860, %v1867
        %v1870 = vunpack.c.l.s4 1934713408
        %v1871 = vunpack.c.0.s8 %v1870
        %v1872 = vlaneseq
        %v1873 = vshrl.u32 %v1872, 7
        %v1874 = vsub.s32 %v1871, %v1873
        %v1875 = vrot.slane %v1861, %v1874
        %v1876 = vcombine.high %v1852, 0.0
        %v1877 = vcombine.high %v1859, 0.0
        %v1878 = vcombine.high %v1868, 0.0
        %v1879 = vcombine.high %v1875, 0.0
        %v1880 = vcombine.low %v1791, %v1799
        %v1881 = vcombine.high %v1791, %v1799
        %v1883 = vunpack.c.l.s4 1983009808
        %v1884 = vunpack.c.0.s8 %v1883
        %v1885 = vlaneseq
        %v1886 = vshrl.u32 %v1885, 7
        %v1887 = vsub.s32 %v1884, %v1886
        %v1888 = vrot.slane %v1880, %v1887
        %v1890 = vunpack.c.l.s4 1983009808
        %v1891 = vunpack.c.0.s8 %v1890
        %v1892 = vlaneseq
        %v1893 = vshrl.u32 %v1892, 7
        %v1894 = vsub.s32 %v1891, %v1893
        %v1895 = vrot.slane %v1881, %v1894
        %v1896 = vcombine.low %v1795, %v1803
        %v1897 = vcombine.high %v1795, %v1803
        %v1899 = vunpack.c.l.s4 1983009808
        %v1900 = vunpack.c.0.s8 %v1899
        %v1901 = vlaneseq
        %v1902 = vshrl.u32 %v1901, 7
        %v1903 = vsub.s32 %v1900, %v1902
        %v1904 = vrot.slane %v1896, %v1903
        %v1906 = vunpack.c.l.s4 1983009808
        %v1907 = vunpack.c.0.s8 %v1906
        %v1908 = vlaneseq
        %v1909 = vshrl.u32 %v1908, 7
        %v1910 = vsub.s32 %v1907, %v1909
        %v1911 = vrot.slane %v1897, %v1910
        %v1912 = vcombine.low %v1888, %v1904
        %v1913 = vcombine.high %v1888, %v1904
        %v1915 = vunpack.c.l.s4 1934713408
        %v1916 = vunpack.c.0.s8 %v1915
        %v1917 = vlaneseq
        %v1918 = vshrl.u32 %v1917, 7
        %v1919 = vsub.s32 %v1916, %v1918
        %v1920 = vrot.slane %v1912, %v1919
        %v1922 = vunpack.c.l.s4 1934713408
        %v1923 = vunpack.c.0.s8 %v1922
        %v1924 = vlaneseq
        %v1925 = vshrl.u32 %v1924, 7
        %v1926 = vsub.s32 %v1923, %v1925
        %v1927 = vrot.slane %v1913, %v1926
        %v1928 = vcombine.low %v1895, %v1911
        %v1929 = vcombine.high %v1895, %v1911
        %v1931 = vunpack.c.l.s4 1934713408
        %v1932 = vunpack.c.0.s8 %v1931
        %v1933 = vlaneseq
        %v1934 = vshrl.u32 %v1933, 7
        %v1935 = vsub.s32 %v1932, %v1934
        %v1936 = vrot.slane %v1928, %v1935
        %v1938 = vunpack.c.l.s4 1934713408
        %v1939 = vunpack.c.0.s8 %v1938
        %v1940 = vlaneseq
        %v1941 = vshrl.u32 %v1940, 7
        %v1942 = vsub.s32 %v1939, %v1941
        %v1943 = vrot.slane %v1929, %v1942
        %v1944 = vcombine.high %v1920, 0.0
        %v1945 = vcombine.high %v1927, 0.0
        %v1946 = vcombine.high %v1936, 0.0
        %v1947 = vcombine.high %v1943, 0.0
        %1949 = vrot.lane.b32.xlu0 %v1876, 16
        %v1950 = vpop.permute.xlu0 %1949
        %1953 = vrot.lane.b32.xlu0 %v1859, 32
        %v1954 = vpop.permute.xlu0 %1953
        %1957 = vrot.lane.b32.xlu0 %v1877, 48
        %v1958 = vpop.permute.xlu0 %1957
        %1961 = vrot.lane.b32.xlu0 %v1868, 64
        %v1962 = vpop.permute.xlu0 %1961
        %1965 = vrot.lane.b32.xlu0 %v1878, 80
        %v1966 = vpop.permute.xlu0 %1965
        %1969 = vrot.lane.b32.xlu0 %v1875, 96
        %v1970 = vpop.permute.xlu0 %1969
        %1973 = vrot.lane.b32.xlu0 %v1879, 112
        %v1974 = vpop.permute.xlu0 %1973
        %1977 = vrot.lane.b32.xlu0 %v1944, 16
        %v1978 = vpop.permute.xlu0 %1977
        %1981 = vrot.lane.b32.xlu0 %v1927, 32
        %v1982 = vpop.permute.xlu0 %1981
        %1985 = vrot.lane.b32.xlu0 %v1945, 48
        %v1986 = vpop.permute.xlu0 %1985
        %1989 = vrot.lane.b32.xlu0 %v1936, 64
        %v1990 = vpop.permute.xlu0 %1989
        %1993 = vrot.lane.b32.xlu0 %v1946, 80
        %v1994 = vpop.permute.xlu0 %1993
        %1997 = vrot.lane.b32.xlu0 %v1943, 96
        %v1998 = vpop.permute.xlu0 %1997
        %2001 = vrot.lane.b32.xlu0 %v1947, 112
        %v2002 = vpop.permute.xlu0 %2001
        %v2004 = vsel %vm387, %v1852, %v1950
        %v2005 = vsel %vm389, %v2004, %v1954
        %v2006 = vsel %vm391, %v2005, %v1958
        %v2007 = vsel %vm393, %v2006, %v1962
        %v2008 = vsel %vm395, %v2007, %v1966
        %v2009 = vsel %vm397, %v2008, %v1970
        %v2010 = vsel %vm399, %v2009, %v1974
        %v2011 = vsel %vm387, %v1920, %v1978
        %v2012 = vsel %vm389, %v2011, %v1982
        %v2013 = vsel %vm391, %v2012, %v1986
        %v2014 = vsel %vm393, %v2013, %v1990
        %v2015 = vsel %vm395, %v2014, %v1994
        %v2016 = vsel %vm397, %v2015, %v1998
        %v2017 = vsel %vm399, %v2016, %v2002
        %v2019 = vsel %vm648, %v1779, 0
        %v2022 = vsel %vm652, %v2010, 0
        %v2025 = vsel %vm652, %v2017, 0
        %2027 = vmatprep.subr.mxu0 %v2025
        %2028 = vmatpush1.msra.mxu0 %v2022
        %2029 = vmatprep.subr.mxu0 0.0
        %2030 = vmatpush1.msra.mxu0 0.0
        %2031 = vmatprep.subr.mxu0 0.0
        %2032 = vmatpush1.msra.mxu0 0.0
        %2033 = vmatprep.subr.mxu0 0.0
        %2034 = vmatpush1.msra.mxu0 0.0
        %2035 = vmatprep.subr.mxu0 0.0
        %2036 = vmatpush1.msra.mxu0 0.0
        %2037 = vmatprep.subr.mxu0 0.0
        %2038 = vmatpush1.msra.mxu0 0.0
        %2039 = vmatprep.subr.mxu0 0.0
        %2040 = vmatpush1.msra.mxu0 0.0
        %2041 = vmatprep.subr.mxu0 0.0
        %2042 = vmatpush1.msra.mxu0 0.0
        %2043 = vmatprep.subr.mxu0 0.0
        %2044 = vmatpush1.msra.mxu0 0.0
        %2045 = vmatprep.subr.mxu0 0.0
        %2046 = vmatpush1.msra.mxu0 0.0
        %2047 = vmatprep.subr.mxu0 0.0
        %2048 = vmatpush1.msra.mxu0 0.0
        %2049 = vmatprep.subr.mxu0 0.0
        %2050 = vmatpush1.msra.mxu0 0.0
        %2051 = vmatprep.subr.mxu0 0.0
        %2052 = vmatpush1.msra.mxu0 0.0
        %2053 = vmatprep.subr.mxu0 0.0
        %2054 = vmatpush1.msra.mxu0 0.0
        %2055 = vmatprep.subr.mxu0 0.0
        %2056 = vmatpush1.msra.mxu0 0.0
        %2057 = vmatprep.subr.mxu0 0.0
        %2058 = vmatpush1.msra.mxu0 0.0
        %2059 = vmatprep.subr.mxu0 0.0
        %2060 = vmatpush1.msra.mxu0 0.0
        %2061 = vmatprep.subr.mxu0 0.0
        %2062 = vmatpush1.msra.mxu0 0.0
        %2063 = vmatprep.subr.mxu0 0.0
        %2064 = vmatpush1.msra.mxu0 0.0
        %2065 = vmatprep.subr.mxu0 0.0
        %2066 = vmatpush1.msra.mxu0 0.0
        %2067 = vmatprep.subr.mxu0 0.0
        %2068 = vmatpush1.msra.mxu0 0.0
        %2069 = vmatprep.subr.mxu0 0.0
        %2070 = vmatpush1.msra.mxu0 0.0
        %2071 = vmatprep.subr.mxu0 0.0
        %2072 = vmatpush1.msra.mxu0 0.0
        %2073 = vmatprep.subr.mxu0 0.0
        %2074 = vmatpush1.msra.mxu0 0.0
        %2075 = vmatprep.subr.mxu0 0.0
        %2076 = vmatpush1.msra.mxu0 0.0
        %2077 = vmatprep.subr.mxu0 0.0
        %2078 = vmatpush1.msra.mxu0 0.0
        %2079 = vmatprep.subr.mxu0 0.0
        %2080 = vmatpush1.msra.mxu0 0.0
        %2081 = vmatprep.subr.mxu0 0.0
        %2082 = vmatpush1.msra.mxu0 0.0
        %2083 = vmatprep.subr.mxu0 0.0
        %2084 = vmatpush1.msra.mxu0 0.0
        %2085 = vmatprep.subr.mxu0 0.0
        %2086 = vmatpush1.msra.mxu0 0.0
        %2087 = vmatprep.subr.mxu0 0.0
        %2088 = vmatpush1.msra.mxu0 0.0
        %2089 = vmatprep.subr.mxu0 0.0
        %2090 = vmatpush1.msra.mxu0 0.0
        %2091 = vmatprep.mubr.f32.mxu0 0.0
        %2092 = vmatmul.mubr.f32.gmra.mrb[0].mxu0 %v2019
        %v2093 = vpop.f32.mrb[0].mxu0
        %v2094 = vadd.f32 0.0, %v2093
        %v2095 = vpop.f32.mrb[0].mxu0
        %v2096 = vadd.f32 0.0, %v2095
        %2097 = vdwg.mxu0
        %v2098 = vadd.f32 %v1768, %v2094
        %v2099 = vadd.f32 %v1769, %v2096
        %s2100 = sadd.s32 %s184, 2
        %s2101 = scalar_lea.vmem %s182, %s2100
        %v2102 = vld [vmem:[%s2101] sm:$0xff]
        %v2103 = vld [vmem:[%s2101 + $0x8] sm:$0xff]
        %v2104 = vld [vmem:[%s2101 + $0x18] sm:$0xff]
        %v2105 = vld [vmem:[%s2101 + $0x20] sm:$0xff]
        %v2106 = vld [vmem:[%s2101 + $0x30] sm:$0xff]
        %v2107 = vld [vmem:[%s2101 + $0x38] sm:$0xff]
        %v2108 = vld [vmem:[%s2101 + $0x48] sm:$0xff]
        %v2109 = vld [vmem:[%s2101 + $0x50] sm:$0xff]
        %s2110 = scalar_lea.vmem %s1, 48
        %v2111 = vld [vmem:[%s2110] sm:$0xff]
        %v2112 = vcombine.low %v2102, %v2106
        %v2113 = vcombine.high %v2102, %v2106
        %v2115 = vunpack.c.l.s4 1983009808
        %v2116 = vunpack.c.0.s8 %v2115
        %v2117 = vlaneseq
        %v2118 = vshrl.u32 %v2117, 7
        %v2119 = vsub.s32 %v2116, %v2118
        %v2120 = vrot.slane %v2112, %v2119
        %v2122 = vunpack.c.l.s4 1983009808
        %v2123 = vunpack.c.0.s8 %v2122
        %v2124 = vlaneseq
        %v2125 = vshrl.u32 %v2124, 7
        %v2126 = vsub.s32 %v2123, %v2125
        %v2127 = vrot.slane %v2113, %v2126
        %v2128 = vcombine.low %v2104, %v2108
        %v2129 = vcombine.high %v2104, %v2108
        %v2131 = vunpack.c.l.s4 1983009808
        %v2132 = vunpack.c.0.s8 %v2131
        %v2133 = vlaneseq
        %v2134 = vshrl.u32 %v2133, 7
        %v2135 = vsub.s32 %v2132, %v2134
        %v2136 = vrot.slane %v2128, %v2135
        %v2138 = vunpack.c.l.s4 1983009808
        %v2139 = vunpack.c.0.s8 %v2138
        %v2140 = vlaneseq
        %v2141 = vshrl.u32 %v2140, 7
        %v2142 = vsub.s32 %v2139, %v2141
        %v2143 = vrot.slane %v2129, %v2142
        %v2144 = vcombine.low %v2120, %v2136
        %v2145 = vcombine.high %v2120, %v2136
        %v2147 = vunpack.c.l.s4 1934713408
        %v2148 = vunpack.c.0.s8 %v2147
        %v2149 = vlaneseq
        %v2150 = vshrl.u32 %v2149, 7
        %v2151 = vsub.s32 %v2148, %v2150
        %v2152 = vrot.slane %v2144, %v2151
        %v2154 = vunpack.c.l.s4 1934713408
        %v2155 = vunpack.c.0.s8 %v2154
        %v2156 = vlaneseq
        %v2157 = vshrl.u32 %v2156, 7
        %v2158 = vsub.s32 %v2155, %v2157
        %v2159 = vrot.slane %v2145, %v2158
        %v2160 = vcombine.low %v2127, %v2143
        %v2161 = vcombine.high %v2127, %v2143
        %v2163 = vunpack.c.l.s4 1934713408
        %v2164 = vunpack.c.0.s8 %v2163
        %v2165 = vlaneseq
        %v2166 = vshrl.u32 %v2165, 7
        %v2167 = vsub.s32 %v2164, %v2166
        %v2168 = vrot.slane %v2160, %v2167
        %v2170 = vunpack.c.l.s4 1934713408
        %v2171 = vunpack.c.0.s8 %v2170
        %v2172 = vlaneseq
        %v2173 = vshrl.u32 %v2172, 7
        %v2174 = vsub.s32 %v2171, %v2173
        %v2175 = vrot.slane %v2161, %v2174
        %v2176 = vcombine.high %v2152, 0.0
        %v2177 = vcombine.high %v2159, 0.0
        %v2178 = vcombine.high %v2168, 0.0
        %v2179 = vcombine.high %v2175, 0.0
        %v2180 = vcombine.low %v2103, %v2107
        %v2181 = vcombine.high %v2103, %v2107
        %v2183 = vunpack.c.l.s4 1983009808
        %v2184 = vunpack.c.0.s8 %v2183
        %v2185 = vlaneseq
        %v2186 = vshrl.u32 %v2185, 7
        %v2187 = vsub.s32 %v2184, %v2186
        %v2188 = vrot.slane %v2180, %v2187
        %v2190 = vunpack.c.l.s4 1983009808
        %v2191 = vunpack.c.0.s8 %v2190
        %v2192 = vlaneseq
        %v2193 = vshrl.u32 %v2192, 7
        %v2194 = vsub.s32 %v2191, %v2193
        %v2195 = vrot.slane %v2181, %v2194
        %v2196 = vcombine.low %v2105, %v2109
        %v2197 = vcombine.high %v2105, %v2109
        %v2199 = vunpack.c.l.s4 1983009808
        %v2200 = vunpack.c.0.s8 %v2199
        %v2201 = vlaneseq
        %v2202 = vshrl.u32 %v2201, 7
        %v2203 = vsub.s32 %v2200, %v2202
        %v2204 = vrot.slane %v2196, %v2203
        %v2206 = vunpack.c.l.s4 1983009808
        %v2207 = vunpack.c.0.s8 %v2206
        %v2208 = vlaneseq
        %v2209 = vshrl.u32 %v2208, 7
        %v2210 = vsub.s32 %v2207, %v2209
        %v2211 = vrot.slane %v2197, %v2210
        %v2212 = vcombine.low %v2188, %v2204
        %v2213 = vcombine.high %v2188, %v2204
        %v2215 = vunpack.c.l.s4 1934713408
        %v2216 = vunpack.c.0.s8 %v2215
        %v2217 = vlaneseq
        %v2218 = vshrl.u32 %v2217, 7
        %v2219 = vsub.s32 %v2216, %v2218
        %v2220 = vrot.slane %v2212, %v2219
        %v2222 = vunpack.c.l.s4 1934713408
        %v2223 = vunpack.c.0.s8 %v2222
        %v2224 = vlaneseq
        %v2225 = vshrl.u32 %v2224, 7
        %v2226 = vsub.s32 %v2223, %v2225
        %v2227 = vrot.slane %v2213, %v2226
        %v2228 = vcombine.low %v2195, %v2211
        %v2229 = vcombine.high %v2195, %v2211
        %v2231 = vunpack.c.l.s4 1934713408
        %v2232 = vunpack.c.0.s8 %v2231
        %v2233 = vlaneseq
        %v2234 = vshrl.u32 %v2233, 7
        %v2235 = vsub.s32 %v2232, %v2234
        %v2236 = vrot.slane %v2228, %v2235
        %v2238 = vunpack.c.l.s4 1934713408
        %v2239 = vunpack.c.0.s8 %v2238
        %v2240 = vlaneseq
        %v2241 = vshrl.u32 %v2240, 7
        %v2242 = vsub.s32 %v2239, %v2241
        %v2243 = vrot.slane %v2229, %v2242
        %v2244 = vcombine.high %v2220, 0.0
        %v2245 = vcombine.high %v2227, 0.0
        %v2246 = vcombine.high %v2236, 0.0
        %v2247 = vcombine.high %v2243, 0.0
        %2249 = vrot.lane.b32.xlu0 %v2176, 16
        %v2250 = vpop.permute.xlu0 %2249
        %2253 = vrot.lane.b32.xlu0 %v2159, 32
        %v2254 = vpop.permute.xlu0 %2253
        %2257 = vrot.lane.b32.xlu0 %v2177, 48
        %v2258 = vpop.permute.xlu0 %2257
        %2261 = vrot.lane.b32.xlu0 %v2168, 64
        %v2262 = vpop.permute.xlu0 %2261
        %2265 = vrot.lane.b32.xlu0 %v2178, 80
        %v2266 = vpop.permute.xlu0 %2265
        %2269 = vrot.lane.b32.xlu0 %v2175, 96
        %v2270 = vpop.permute.xlu0 %2269
        %2273 = vrot.lane.b32.xlu0 %v2179, 112
        %v2274 = vpop.permute.xlu0 %2273
        %2277 = vrot.lane.b32.xlu0 %v2244, 16
        %v2278 = vpop.permute.xlu0 %2277
        %2281 = vrot.lane.b32.xlu0 %v2227, 32
        %v2282 = vpop.permute.xlu0 %2281
        %2285 = vrot.lane.b32.xlu0 %v2245, 48
        %v2286 = vpop.permute.xlu0 %2285
        %2289 = vrot.lane.b32.xlu0 %v2236, 64
        %v2290 = vpop.permute.xlu0 %2289
        %2293 = vrot.lane.b32.xlu0 %v2246, 80
        %v2294 = vpop.permute.xlu0 %2293
        %2297 = vrot.lane.b32.xlu0 %v2243, 96
        %v2298 = vpop.permute.xlu0 %2297
        %2301 = vrot.lane.b32.xlu0 %v2247, 112
        %v2302 = vpop.permute.xlu0 %2301
        %v2304 = vsel %vm387, %v2152, %v2250
        %v2305 = vsel %vm389, %v2304, %v2254
        %v2306 = vsel %vm391, %v2305, %v2258
        %v2307 = vsel %vm393, %v2306, %v2262
        %v2308 = vsel %vm395, %v2307, %v2266
        %v2309 = vsel %vm397, %v2308, %v2270
        %v2310 = vsel %vm399, %v2309, %v2274
        %v2311 = vsel %vm387, %v2220, %v2278
        %v2312 = vsel %vm389, %v2311, %v2282
        %v2313 = vsel %vm391, %v2312, %v2286
        %v2314 = vsel %vm393, %v2313, %v2290
        %v2315 = vsel %vm395, %v2314, %v2294
        %v2316 = vsel %vm397, %v2315, %v2298
        %v2317 = vsel %vm399, %v2316, %v2302
        %v2319 = vsel %vm648, %v2111, 0
        %v2322 = vsel %vm652, %v2310, 0
        %v2325 = vsel %vm652, %v2317, 0
        %2327 = vmatprep.subr.mxu0 %v2325
        %2328 = vmatpush1.msra.mxu0 %v2322
        %2329 = vmatprep.subr.mxu0 0.0
        %2330 = vmatpush1.msra.mxu0 0.0
        %2331 = vmatprep.subr.mxu0 0.0
        %2332 = vmatpush1.msra.mxu0 0.0
        %2333 = vmatprep.subr.mxu0 0.0
        %2334 = vmatpush1.msra.mxu0 0.0
        %2335 = vmatprep.subr.mxu0 0.0
        %2336 = vmatpush1.msra.mxu0 0.0
        %2337 = vmatprep.subr.mxu0 0.0
        %2338 = vmatpush1.msra.mxu0 0.0
        %2339 = vmatprep.subr.mxu0 0.0
        %2340 = vmatpush1.msra.mxu0 0.0
        %2341 = vmatprep.subr.mxu0 0.0
        %2342 = vmatpush1.msra.mxu0 0.0
        %2343 = vmatprep.subr.mxu0 0.0
        %2344 = vmatpush1.msra.mxu0 0.0
        %2345 = vmatprep.subr.mxu0 0.0
        %2346 = vmatpush1.msra.mxu0 0.0
        %2347 = vmatprep.subr.mxu0 0.0
        %2348 = vmatpush1.msra.mxu0 0.0
        %2349 = vmatprep.subr.mxu0 0.0
        %2350 = vmatpush1.msra.mxu0 0.0
        %2351 = vmatprep.subr.mxu0 0.0
        %2352 = vmatpush1.msra.mxu0 0.0
        %2353 = vmatprep.subr.mxu0 0.0
        %2354 = vmatpush1.msra.mxu0 0.0
        %2355 = vmatprep.subr.mxu0 0.0
        %2356 = vmatpush1.msra.mxu0 0.0
        %2357 = vmatprep.subr.mxu0 0.0
        %2358 = vmatpush1.msra.mxu0 0.0
        %2359 = vmatprep.subr.mxu0 0.0
        %2360 = vmatpush1.msra.mxu0 0.0
        %2361 = vmatprep.subr.mxu0 0.0
        %2362 = vmatpush1.msra.mxu0 0.0
        %2363 = vmatprep.subr.mxu0 0.0
        %2364 = vmatpush1.msra.mxu0 0.0
        %2365 = vmatprep.subr.mxu0 0.0
        %2366 = vmatpush1.msra.mxu0 0.0
        %2367 = vmatprep.subr.mxu0 0.0
        %2368 = vmatpush1.msra.mxu0 0.0
        %2369 = vmatprep.subr.mxu0 0.0
        %2370 = vmatpush1.msra.mxu0 0.0
        %2371 = vmatprep.subr.mxu0 0.0
        %2372 = vmatpush1.msra.mxu0 0.0
        %2373 = vmatprep.subr.mxu0 0.0
        %2374 = vmatpush1.msra.mxu0 0.0
        %2375 = vmatprep.subr.mxu0 0.0
        %2376 = vmatpush1.msra.mxu0 0.0
        %2377 = vmatprep.subr.mxu0 0.0
        %2378 = vmatpush1.msra.mxu0 0.0
        %2379 = vmatprep.subr.mxu0 0.0
        %2380 = vmatpush1.msra.mxu0 0.0
        %2381 = vmatprep.subr.mxu0 0.0
        %2382 = vmatpush1.msra.mxu0 0.0
        %2383 = vmatprep.subr.mxu0 0.0
        %2384 = vmatpush1.msra.mxu0 0.0
        %2385 = vmatprep.subr.mxu0 0.0
        %2386 = vmatpush1.msra.mxu0 0.0
        %2387 = vmatprep.subr.mxu0 0.0
        %2388 = vmatpush1.msra.mxu0 0.0
        %2389 = vmatprep.subr.mxu0 0.0
        %2390 = vmatpush1.msra.mxu0 0.0
        %2391 = vmatprep.mubr.f32.mxu0 0.0
        %2392 = vmatmul.mubr.f32.gmra.mrb[0].mxu0 %v2319
        %v2393 = vpop.f32.mrb[0].mxu0
        %v2394 = vadd.f32 0.0, %v2393
        %v2395 = vpop.f32.mrb[0].mxu0
        %v2396 = vadd.f32 0.0, %v2395
        %2397 = vdwg.mxu0
        %v2398 = vadd.f32 %v2098, %v2394
        %v2399 = vadd.f32 %v2099, %v2396
        %v2400 = vld [vmem:[%s2101] sm:$0xff]
        %v2401 = vld [vmem:[%s2101 + $0x8] sm:$0xff]
        %v2402 = vld [vmem:[%s2101 + $0x18] sm:$0xff]
        %v2403 = vld [vmem:[%s2101 + $0x20] sm:$0xff]
        %v2404 = vld [vmem:[%s2101 + $0x30] sm:$0xff]
        %v2405 = vld [vmem:[%s2101 + $0x38] sm:$0xff]
        %v2406 = vld [vmem:[%s2101 + $0x48] sm:$0xff]
        %v2407 = vld [vmem:[%s2101 + $0x50] sm:$0xff]
        %s2408 = scalar_lea.vmem %s1, 56
        %v2409 = vld [vmem:[%s2408] sm:$0xff]
        %2418 = vrot.lane.b32.xlu0 %v2400, 127
        %v2419 = vpop.permute.xlu0 %2418
        %2420 = vrot.lane.b32.xlu0 %v2401, 127
        %v2421 = vpop.permute.xlu0 %2420
        %2422 = vrot.lane.b32.xlu0 %v2402, 127
        %v2423 = vpop.permute.xlu0 %2422
        %2424 = vrot.lane.b32.xlu0 %v2403, 127
        %v2425 = vpop.permute.xlu0 %2424
        %2426 = vrot.lane.b32.xlu0 %v2404, 127
        %v2427 = vpop.permute.xlu0 %2426
        %2428 = vrot.lane.b32.xlu0 %v2405, 127
        %v2429 = vpop.permute.xlu0 %2428
        %2430 = vrot.lane.b32.xlu0 %v2406, 127
        %v2431 = vpop.permute.xlu0 %2430
        %2432 = vrot.lane.b32.xlu0 %v2407, 127
        %v2433 = vpop.permute.xlu0 %2432
        %v2442 = vcombine.low %v2419, %v2427
        %v2443 = vcombine.high %v2419, %v2427
        %v2445 = vunpack.c.l.s4 1983009808
        %v2446 = vunpack.c.0.s8 %v2445
        %v2447 = vlaneseq
        %v2448 = vshrl.u32 %v2447, 7
        %v2449 = vsub.s32 %v2446, %v2448
        %v2450 = vrot.slane %v2442, %v2449
        %v2452 = vunpack.c.l.s4 1983009808
        %v2453 = vunpack.c.0.s8 %v2452
        %v2454 = vlaneseq
        %v2455 = vshrl.u32 %v2454, 7
        %v2456 = vsub.s32 %v2453, %v2455
        %v2457 = vrot.slane %v2443, %v2456
        %v2458 = vcombine.low %v2423, %v2431
        %v2459 = vcombine.high %v2423, %v2431
        %v2461 = vunpack.c.l.s4 1983009808
        %v2462 = vunpack.c.0.s8 %v2461
        %v2463 = vlaneseq
        %v2464 = vshrl.u32 %v2463, 7
        %v2465 = vsub.s32 %v2462, %v2464
        %v2466 = vrot.slane %v2458, %v2465
        %v2468 = vunpack.c.l.s4 1983009808
        %v2469 = vunpack.c.0.s8 %v2468
        %v2470 = vlaneseq
        %v2471 = vshrl.u32 %v2470, 7
        %v2472 = vsub.s32 %v2469, %v2471
        %v2473 = vrot.slane %v2459, %v2472
        %v2474 = vcombine.low %v2450, %v2466
        %v2475 = vcombine.high %v2450, %v2466
        %v2477 = vunpack.c.l.s4 1934713408
        %v2478 = vunpack.c.0.s8 %v2477
        %v2479 = vlaneseq
        %v2480 = vshrl.u32 %v2479, 7
        %v2481 = vsub.s32 %v2478, %v2480
        %v2482 = vrot.slane %v2474, %v2481
        %v2484 = vunpack.c.l.s4 1934713408
        %v2485 = vunpack.c.0.s8 %v2484
        %v2486 = vlaneseq
        %v2487 = vshrl.u32 %v2486, 7
        %v2488 = vsub.s32 %v2485, %v2487
        %v2489 = vrot.slane %v2475, %v2488
        %v2490 = vcombine.low %v2457, %v2473
        %v2491 = vcombine.high %v2457, %v2473
        %v2493 = vunpack.c.l.s4 1934713408
        %v2494 = vunpack.c.0.s8 %v2493
        %v2495 = vlaneseq
        %v2496 = vshrl.u32 %v2495, 7
        %v2497 = vsub.s32 %v2494, %v2496
        %v2498 = vrot.slane %v2490, %v2497
        %v2500 = vunpack.c.l.s4 1934713408
        %v2501 = vunpack.c.0.s8 %v2500
        %v2502 = vlaneseq
        %v2503 = vshrl.u32 %v2502, 7
        %v2504 = vsub.s32 %v2501, %v2503
        %v2505 = vrot.slane %v2491, %v2504
        %v2506 = vcombine.high %v2482, 0.0
        %v2507 = vcombine.high %v2489, 0.0
        %v2508 = vcombine.high %v2498, 0.0
        %v2509 = vcombine.high %v2505, 0.0
        %v2510 = vcombine.low %v2421, %v2429
        %v2511 = vcombine.high %v2421, %v2429
        %v2513 = vunpack.c.l.s4 1983009808
        %v2514 = vunpack.c.0.s8 %v2513
        %v2515 = vlaneseq
        %v2516 = vshrl.u32 %v2515, 7
        %v2517 = vsub.s32 %v2514, %v2516
        %v2518 = vrot.slane %v2510, %v2517
        %v2520 = vunpack.c.l.s4 1983009808
        %v2521 = vunpack.c.0.s8 %v2520
        %v2522 = vlaneseq
        %v2523 = vshrl.u32 %v2522, 7
        %v2524 = vsub.s32 %v2521, %v2523
        %v2525 = vrot.slane %v2511, %v2524
        %v2526 = vcombine.low %v2425, %v2433
        %v2527 = vcombine.high %v2425, %v2433
        %v2529 = vunpack.c.l.s4 1983009808
        %v2530 = vunpack.c.0.s8 %v2529
        %v2531 = vlaneseq
        %v2532 = vshrl.u32 %v2531, 7
        %v2533 = vsub.s32 %v2530, %v2532
        %v2534 = vrot.slane %v2526, %v2533
        %v2536 = vunpack.c.l.s4 1983009808
        %v2537 = vunpack.c.0.s8 %v2536
        %v2538 = vlaneseq
        %v2539 = vshrl.u32 %v2538, 7
        %v2540 = vsub.s32 %v2537, %v2539
        %v2541 = vrot.slane %v2527, %v2540
        %v2542 = vcombine.low %v2518, %v2534
        %v2543 = vcombine.high %v2518, %v2534
        %v2545 = vunpack.c.l.s4 1934713408
        %v2546 = vunpack.c.0.s8 %v2545
        %v2547 = vlaneseq
        %v2548 = vshrl.u32 %v2547, 7
        %v2549 = vsub.s32 %v2546, %v2548
        %v2550 = vrot.slane %v2542, %v2549
        %v2552 = vunpack.c.l.s4 1934713408
        %v2553 = vunpack.c.0.s8 %v2552
        %v2554 = vlaneseq
        %v2555 = vshrl.u32 %v2554, 7
        %v2556 = vsub.s32 %v2553, %v2555
        %v2557 = vrot.slane %v2543, %v2556
        %v2558 = vcombine.low %v2525, %v2541
        %v2559 = vcombine.high %v2525, %v2541
        %v2561 = vunpack.c.l.s4 1934713408
        %v2562 = vunpack.c.0.s8 %v2561
        %v2563 = vlaneseq
        %v2564 = vshrl.u32 %v2563, 7
        %v2565 = vsub.s32 %v2562, %v2564
        %v2566 = vrot.slane %v2558, %v2565
        %v2568 = vunpack.c.l.s4 1934713408
        %v2569 = vunpack.c.0.s8 %v2568
        %v2570 = vlaneseq
        %v2571 = vshrl.u32 %v2570, 7
        %v2572 = vsub.s32 %v2569, %v2571
        %v2573 = vrot.slane %v2559, %v2572
        %v2574 = vcombine.high %v2550, 0.0
        %v2575 = vcombine.high %v2557, 0.0
        %v2576 = vcombine.high %v2566, 0.0
        %v2577 = vcombine.high %v2573, 0.0
        %2579 = vrot.lane.b32.xlu0 %v2506, 16
        %v2580 = vpop.permute.xlu0 %2579
        %2583 = vrot.lane.b32.xlu0 %v2489, 32
        %v2584 = vpop.permute.xlu0 %2583
        %2587 = vrot.lane.b32.xlu0 %v2507, 48
        %v2588 = vpop.permute.xlu0 %2587
        %2591 = vrot.lane.b32.xlu0 %v2498, 64
        %v2592 = vpop.permute.xlu0 %2591
        %2595 = vrot.lane.b32.xlu0 %v2508, 80
        %v2596 = vpop.permute.xlu0 %2595
        %2599 = vrot.lane.b32.xlu0 %v2505, 96
        %v2600 = vpop.permute.xlu0 %2599
        %2603 = vrot.lane.b32.xlu0 %v2509, 112
        %v2604 = vpop.permute.xlu0 %2603
        %2607 = vrot.lane.b32.xlu0 %v2574, 16
        %v2608 = vpop.permute.xlu0 %2607
        %2611 = vrot.lane.b32.xlu0 %v2557, 32
        %v2612 = vpop.permute.xlu0 %2611
        %2615 = vrot.lane.b32.xlu0 %v2575, 48
        %v2616 = vpop.permute.xlu0 %2615
        %2619 = vrot.lane.b32.xlu0 %v2566, 64
        %v2620 = vpop.permute.xlu0 %2619
        %2623 = vrot.lane.b32.xlu0 %v2576, 80
        %v2624 = vpop.permute.xlu0 %2623
        %2627 = vrot.lane.b32.xlu0 %v2573, 96
        %v2628 = vpop.permute.xlu0 %2627
        %2631 = vrot.lane.b32.xlu0 %v2577, 112
        %v2632 = vpop.permute.xlu0 %2631
        %v2634 = vsel %vm387, %v2482, %v2580
        %v2635 = vsel %vm389, %v2634, %v2584
        %v2636 = vsel %vm391, %v2635, %v2588
        %v2637 = vsel %vm393, %v2636, %v2592
        %v2638 = vsel %vm395, %v2637, %v2596
        %v2639 = vsel %vm397, %v2638, %v2600
        %v2640 = vsel %vm399, %v2639, %v2604
        %v2641 = vsel %vm387, %v2550, %v2608
        %v2642 = vsel %vm389, %v2641, %v2612
        %v2643 = vsel %vm391, %v2642, %v2616
        %v2644 = vsel %vm393, %v2643, %v2620
        %v2645 = vsel %vm395, %v2644, %v2624
        %v2646 = vsel %vm397, %v2645, %v2628
        %v2647 = vsel %vm399, %v2646, %v2632
        %v2649 = vsel %vm648, %v2409, 0
        %v2652 = vsel %vm652, %v2640, 0
        %v2655 = vsel %vm652, %v2647, 0
        %2657 = vmatprep.subr.mxu0 %v2655
        %2658 = vmatpush1.msra.mxu0 %v2652
        %2659 = vmatprep.subr.mxu0 0.0
        %2660 = vmatpush1.msra.mxu0 0.0
        %2661 = vmatprep.subr.mxu0 0.0
        %2662 = vmatpush1.msra.mxu0 0.0
        %2663 = vmatprep.subr.mxu0 0.0
        %2664 = vmatpush1.msra.mxu0 0.0
        %2665 = vmatprep.subr.mxu0 0.0
        %2666 = vmatpush1.msra.mxu0 0.0
        %2667 = vmatprep.subr.mxu0 0.0
        %2668 = vmatpush1.msra.mxu0 0.0
        %2669 = vmatprep.subr.mxu0 0.0
        %2670 = vmatpush1.msra.mxu0 0.0
        %2671 = vmatprep.subr.mxu0 0.0
        %2672 = vmatpush1.msra.mxu0 0.0
        %2673 = vmatprep.subr.mxu0 0.0
        %2674 = vmatpush1.msra.mxu0 0.0
        %2675 = vmatprep.subr.mxu0 0.0
        %2676 = vmatpush1.msra.mxu0 0.0
        %2677 = vmatprep.subr.mxu0 0.0
        %2678 = vmatpush1.msra.mxu0 0.0
        %2679 = vmatprep.subr.mxu0 0.0
        %2680 = vmatpush1.msra.mxu0 0.0
        %2681 = vmatprep.subr.mxu0 0.0
        %2682 = vmatpush1.msra.mxu0 0.0
        %2683 = vmatprep.subr.mxu0 0.0
        %2684 = vmatpush1.msra.mxu0 0.0
        %2685 = vmatprep.subr.mxu0 0.0
        %2686 = vmatpush1.msra.mxu0 0.0
        %2687 = vmatprep.subr.mxu0 0.0
        %2688 = vmatpush1.msra.mxu0 0.0
        %2689 = vmatprep.subr.mxu0 0.0
        %2690 = vmatpush1.msra.mxu0 0.0
        %2691 = vmatprep.subr.mxu0 0.0
        %2692 = vmatpush1.msra.mxu0 0.0
        %2693 = vmatprep.subr.mxu0 0.0
        %2694 = vmatpush1.msra.mxu0 0.0
        %2695 = vmatprep.subr.mxu0 0.0
        %2696 = vmatpush1.msra.mxu0 0.0
        %2697 = vmatprep.subr.mxu0 0.0
        %2698 = vmatpush1.msra.mxu0 0.0
        %2699 = vmatprep.subr.mxu0 0.0
        %2700 = vmatpush1.msra.mxu0 0.0
        %2701 = vmatprep.subr.mxu0 0.0
        %2702 = vmatpush1.msra.mxu0 0.0
        %2703 = vmatprep.subr.mxu0 0.0
        %2704 = vmatpush1.msra.mxu0 0.0
        %2705 = vmatprep.subr.mxu0 0.0
        %2706 = vmatpush1.msra.mxu0 0.0
        %2707 = vmatprep.subr.mxu0 0.0
        %2708 = vmatpush1.msra.mxu0 0.0
        %2709 = vmatprep.subr.mxu0 0.0
        %2710 = vmatpush1.msra.mxu0 0.0
        %2711 = vmatprep.subr.mxu0 0.0
        %2712 = vmatpush1.msra.mxu0 0.0
        %2713 = vmatprep.subr.mxu0 0.0
        %2714 = vmatpush1.msra.mxu0 0.0
        %2715 = vmatprep.subr.mxu0 0.0
        %2716 = vmatpush1.msra.mxu0 0.0
        %2717 = vmatprep.subr.mxu0 0.0
        %2718 = vmatpush1.msra.mxu0 0.0
        %2719 = vmatprep.subr.mxu0 0.0
        %2720 = vmatpush1.msra.mxu0 0.0
        %2721 = vmatprep.mubr.f32.mxu0 0.0
        %2722 = vmatmul.mubr.f32.gmra.mrb[0].mxu0 %v2649
        %v2723 = vpop.f32.mrb[0].mxu0
        %v2724 = vadd.f32 0.0, %v2723
        %v2725 = vpop.f32.mrb[0].mxu0
        %v2726 = vadd.f32 0.0, %v2725
        %2727 = vdwg.mxu0
        %v2728 = vadd.f32 %v2398, %v2724
        %v2729 = vadd.f32 %v2399, %v2726
        %v2730 = vld [vmem:[%s2101] sm:$0xff]
        %v2731 = vld [vmem:[%s2101 + $0x8] sm:$0xff]
        %v2732 = vld [vmem:[%s2101 + $0x18] sm:$0xff]
        %v2733 = vld [vmem:[%s2101 + $0x20] sm:$0xff]
        %v2734 = vld [vmem:[%s2101 + $0x30] sm:$0xff]
        %v2735 = vld [vmem:[%s2101 + $0x38] sm:$0xff]
        %v2736 = vld [vmem:[%s2101 + $0x48] sm:$0xff]
        %v2737 = vld [vmem:[%s2101 + $0x50] sm:$0xff]
        %s2738 = scalar_lea.vmem %s1, 64
        %v2739 = vld [vmem:[%s2738] sm:$0xff]
        %2748 = vrot.lane.b32.xlu0 %v2730, 126
        %v2749 = vpop.permute.xlu0 %2748
        %2750 = vrot.lane.b32.xlu0 %v2731, 126
        %v2751 = vpop.permute.xlu0 %2750
        %2752 = vrot.lane.b32.xlu0 %v2732, 126
        %v2753 = vpop.permute.xlu0 %2752
        %2754 = vrot.lane.b32.xlu0 %v2733, 126
        %v2755 = vpop.permute.xlu0 %2754
        %2756 = vrot.lane.b32.xlu0 %v2734, 126
        %v2757 = vpop.permute.xlu0 %2756
        %2758 = vrot.lane.b32.xlu0 %v2735, 126
        %v2759 = vpop.permute.xlu0 %2758
        %2760 = vrot.lane.b32.xlu0 %v2736, 126
        %v2761 = vpop.permute.xlu0 %2760
        %2762 = vrot.lane.b32.xlu0 %v2737, 126
        %v2763 = vpop.permute.xlu0 %2762
        %v2772 = vcombine.low %v2749, %v2757
        %v2773 = vcombine.high %v2749, %v2757
        %v2775 = vunpack.c.l.s4 1983009808
        %v2776 = vunpack.c.0.s8 %v2775
        %v2777 = vlaneseq
        %v2778 = vshrl.u32 %v2777, 7
        %v2779 = vsub.s32 %v2776, %v2778
        %v2780 = vrot.slane %v2772, %v2779
        %v2782 = vunpack.c.l.s4 1983009808
        %v2783 = vunpack.c.0.s8 %v2782
        %v2784 = vlaneseq
        %v2785 = vshrl.u32 %v2784, 7
        %v2786 = vsub.s32 %v2783, %v2785
        %v2787 = vrot.slane %v2773, %v2786
        %v2788 = vcombine.low %v2753, %v2761
        %v2789 = vcombine.high %v2753, %v2761
        %v2791 = vunpack.c.l.s4 1983009808
        %v2792 = vunpack.c.0.s8 %v2791
        %v2793 = vlaneseq
        %v2794 = vshrl.u32 %v2793, 7
        %v2795 = vsub.s32 %v2792, %v2794
        %v2796 = vrot.slane %v2788, %v2795
        %v2798 = vunpack.c.l.s4 1983009808
        %v2799 = vunpack.c.0.s8 %v2798
        %v2800 = vlaneseq
        %v2801 = vshrl.u32 %v2800, 7
        %v2802 = vsub.s32 %v2799, %v2801
        %v2803 = vrot.slane %v2789, %v2802
        %v2804 = vcombine.low %v2780, %v2796
        %v2805 = vcombine.high %v2780, %v2796
        %v2807 = vunpack.c.l.s4 1934713408
        %v2808 = vunpack.c.0.s8 %v2807
        %v2809 = vlaneseq
        %v2810 = vshrl.u32 %v2809, 7
        %v2811 = vsub.s32 %v2808, %v2810
        %v2812 = vrot.slane %v2804, %v2811
        %v2814 = vunpack.c.l.s4 1934713408
        %v2815 = vunpack.c.0.s8 %v2814
        %v2816 = vlaneseq
        %v2817 = vshrl.u32 %v2816, 7
        %v2818 = vsub.s32 %v2815, %v2817
        %v2819 = vrot.slane %v2805, %v2818
        %v2820 = vcombine.low %v2787, %v2803
        %v2821 = vcombine.high %v2787, %v2803
        %v2823 = vunpack.c.l.s4 1934713408
        %v2824 = vunpack.c.0.s8 %v2823
        %v2825 = vlaneseq
        %v2826 = vshrl.u32 %v2825, 7
        %v2827 = vsub.s32 %v2824, %v2826
        %v2828 = vrot.slane %v2820, %v2827
        %v2830 = vunpack.c.l.s4 1934713408
        %v2831 = vunpack.c.0.s8 %v2830
        %v2832 = vlaneseq
        %v2833 = vshrl.u32 %v2832, 7
        %v2834 = vsub.s32 %v2831, %v2833
        %v2835 = vrot.slane %v2821, %v2834
        %v2836 = vcombine.high %v2812, 0.0
        %v2837 = vcombine.high %v2819, 0.0
        %v2838 = vcombine.high %v2828, 0.0
        %v2839 = vcombine.high %v2835, 0.0
        %v2840 = vcombine.low %v2751, %v2759
        %v2841 = vcombine.high %v2751, %v2759
        %v2843 = vunpack.c.l.s4 1983009808
        %v2844 = vunpack.c.0.s8 %v2843
        %v2845 = vlaneseq
        %v2846 = vshrl.u32 %v2845, 7
        %v2847 = vsub.s32 %v2844, %v2846
        %v2848 = vrot.slane %v2840, %v2847
        %v2850 = vunpack.c.l.s4 1983009808
        %v2851 = vunpack.c.0.s8 %v2850
        %v2852 = vlaneseq
        %v2853 = vshrl.u32 %v2852, 7
        %v2854 = vsub.s32 %v2851, %v2853
        %v2855 = vrot.slane %v2841, %v2854
        %v2856 = vcombine.low %v2755, %v2763
        %v2857 = vcombine.high %v2755, %v2763
        %v2859 = vunpack.c.l.s4 1983009808
        %v2860 = vunpack.c.0.s8 %v2859
        %v2861 = vlaneseq
        %v2862 = vshrl.u32 %v2861, 7
        %v2863 = vsub.s32 %v2860, %v2862
        %v2864 = vrot.slane %v2856, %v2863
        %v2866 = vunpack.c.l.s4 1983009808
        %v2867 = vunpack.c.0.s8 %v2866
        %v2868 = vlaneseq
        %v2869 = vshrl.u32 %v2868, 7
        %v2870 = vsub.s32 %v2867, %v2869
        %v2871 = vrot.slane %v2857, %v2870
        %v2872 = vcombine.low %v2848, %v2864
        %v2873 = vcombine.high %v2848, %v2864
        %v2875 = vunpack.c.l.s4 1934713408
        %v2876 = vunpack.c.0.s8 %v2875
        %v2877 = vlaneseq
        %v2878 = vshrl.u32 %v2877, 7
        %v2879 = vsub.s32 %v2876, %v2878
        %v2880 = vrot.slane %v2872, %v2879
        %v2882 = vunpack.c.l.s4 1934713408
        %v2883 = vunpack.c.0.s8 %v2882
        %v2884 = vlaneseq
        %v2885 = vshrl.u32 %v2884, 7
        %v2886 = vsub.s32 %v2883, %v2885
        %v2887 = vrot.slane %v2873, %v2886
        %v2888 = vcombine.low %v2855, %v2871
        %v2889 = vcombine.high %v2855, %v2871
        %v2891 = vunpack.c.l.s4 1934713408
        %v2892 = vunpack.c.0.s8 %v2891
        %v2893 = vlaneseq
        %v2894 = vshrl.u32 %v2893, 7
        %v2895 = vsub.s32 %v2892, %v2894
        %v2896 = vrot.slane %v2888, %v2895
        %v2898 = vunpack.c.l.s4 1934713408
        %v2899 = vunpack.c.0.s8 %v2898
        %v2900 = vlaneseq
        %v2901 = vshrl.u32 %v2900, 7
        %v2902 = vsub.s32 %v2899, %v2901
        %v2903 = vrot.slane %v2889, %v2902
        %v2904 = vcombine.high %v2880, 0.0
        %v2905 = vcombine.high %v2887, 0.0
        %v2906 = vcombine.high %v2896, 0.0
        %v2907 = vcombine.high %v2903, 0.0
        %2909 = vrot.lane.b32.xlu0 %v2836, 16
        %v2910 = vpop.permute.xlu0 %2909
        %2913 = vrot.lane.b32.xlu0 %v2819, 32
        %v2914 = vpop.permute.xlu0 %2913
        %2917 = vrot.lane.b32.xlu0 %v2837, 48
        %v2918 = vpop.permute.xlu0 %2917
        %2921 = vrot.lane.b32.xlu0 %v2828, 64
        %v2922 = vpop.permute.xlu0 %2921
        %2925 = vrot.lane.b32.xlu0 %v2838, 80
        %v2926 = vpop.permute.xlu0 %2925
        %2929 = vrot.lane.b32.xlu0 %v2835, 96
        %v2930 = vpop.permute.xlu0 %2929
        %2933 = vrot.lane.b32.xlu0 %v2839, 112
        %v2934 = vpop.permute.xlu0 %2933
        %2937 = vrot.lane.b32.xlu0 %v2904, 16
        %v2938 = vpop.permute.xlu0 %2937
        %2941 = vrot.lane.b32.xlu0 %v2887, 32
        %v2942 = vpop.permute.xlu0 %2941
        %2945 = vrot.lane.b32.xlu0 %v2905, 48
        %v2946 = vpop.permute.xlu0 %2945
        %2949 = vrot.lane.b32.xlu0 %v2896, 64
        %v2950 = vpop.permute.xlu0 %2949
        %2953 = vrot.lane.b32.xlu0 %v2906, 80
        %v2954 = vpop.permute.xlu0 %2953
        %2957 = vrot.lane.b32.xlu0 %v2903, 96
        %v2958 = vpop.permute.xlu0 %2957
        %2961 = vrot.lane.b32.xlu0 %v2907, 112
        %v2962 = vpop.permute.xlu0 %2961
        %v2964 = vsel %vm387, %v2812, %v2910
        %v2965 = vsel %vm389, %v2964, %v2914
        %v2966 = vsel %vm391, %v2965, %v2918
        %v2967 = vsel %vm393, %v2966, %v2922
        %v2968 = vsel %vm395, %v2967, %v2926
        %v2969 = vsel %vm397, %v2968, %v2930
        %v2970 = vsel %vm399, %v2969, %v2934
        %v2971 = vsel %vm387, %v2880, %v2938
        %v2972 = vsel %vm389, %v2971, %v2942
        %v2973 = vsel %vm391, %v2972, %v2946
        %v2974 = vsel %vm393, %v2973, %v2950
        %v2975 = vsel %vm395, %v2974, %v2954
        %v2976 = vsel %vm397, %v2975, %v2958
        %v2977 = vsel %vm399, %v2976, %v2962
        %v2979 = vsel %vm648, %v2739, 0
        %v2982 = vsel %vm652, %v2970, 0
        %v2985 = vsel %vm652, %v2977, 0
        %2987 = vmatprep.subr.mxu0 %v2985
        %2988 = vmatpush1.msra.mxu0 %v2982
        %2989 = vmatprep.subr.mxu0 0.0
        %2990 = vmatpush1.msra.mxu0 0.0
        %2991 = vmatprep.subr.mxu0 0.0
        %2992 = vmatpush1.msra.mxu0 0.0
        %2993 = vmatprep.subr.mxu0 0.0
        %2994 = vmatpush1.msra.mxu0 0.0
        %2995 = vmatprep.subr.mxu0 0.0
        %2996 = vmatpush1.msra.mxu0 0.0
        %2997 = vmatprep.subr.mxu0 0.0
        %2998 = vmatpush1.msra.mxu0 0.0
        %2999 = vmatprep.subr.mxu0 0.0
        %3000 = vmatpush1.msra.mxu0 0.0
        %3001 = vmatprep.subr.mxu0 0.0
        %3002 = vmatpush1.msra.mxu0 0.0
        %3003 = vmatprep.subr.mxu0 0.0
        %3004 = vmatpush1.msra.mxu0 0.0
        %3005 = vmatprep.subr.mxu0 0.0
        %3006 = vmatpush1.msra.mxu0 0.0
        %3007 = vmatprep.subr.mxu0 0.0
        %3008 = vmatpush1.msra.mxu0 0.0
        %3009 = vmatprep.subr.mxu0 0.0
        %3010 = vmatpush1.msra.mxu0 0.0
        %3011 = vmatprep.subr.mxu0 0.0
        %3012 = vmatpush1.msra.mxu0 0.0
        %3013 = vmatprep.subr.mxu0 0.0
        %3014 = vmatpush1.msra.mxu0 0.0
        %3015 = vmatprep.subr.mxu0 0.0
        %3016 = vmatpush1.msra.mxu0 0.0
        %3017 = vmatprep.subr.mxu0 0.0
        %3018 = vmatpush1.msra.mxu0 0.0
        %3019 = vmatprep.subr.mxu0 0.0
        %3020 = vmatpush1.msra.mxu0 0.0
        %3021 = vmatprep.subr.mxu0 0.0
        %3022 = vmatpush1.msra.mxu0 0.0
        %3023 = vmatprep.subr.mxu0 0.0
        %3024 = vmatpush1.msra.mxu0 0.0
        %3025 = vmatprep.subr.mxu0 0.0
        %3026 = vmatpush1.msra.mxu0 0.0
        %3027 = vmatprep.subr.mxu0 0.0
        %3028 = vmatpush1.msra.mxu0 0.0
        %3029 = vmatprep.subr.mxu0 0.0
        %3030 = vmatpush1.msra.mxu0 0.0
        %3031 = vmatprep.subr.mxu0 0.0
        %3032 = vmatpush1.msra.mxu0 0.0
        %3033 = vmatprep.subr.mxu0 0.0
        %3034 = vmatpush1.msra.mxu0 0.0
        %3035 = vmatprep.subr.mxu0 0.0
        %3036 = vmatpush1.msra.mxu0 0.0
        %3037 = vmatprep.subr.mxu0 0.0
        %3038 = vmatpush1.msra.mxu0 0.0
        %3039 = vmatprep.subr.mxu0 0.0
        %3040 = vmatpush1.msra.mxu0 0.0
        %3041 = vmatprep.subr.mxu0 0.0
        %3042 = vmatpush1.msra.mxu0 0.0
        %3043 = vmatprep.subr.mxu0 0.0
        %3044 = vmatpush1.msra.mxu0 0.0
        %3045 = vmatprep.subr.mxu0 0.0
        %3046 = vmatpush1.msra.mxu0 0.0
        %3047 = vmatprep.subr.mxu0 0.0
        %3048 = vmatpush1.msra.mxu0 0.0
        %3049 = vmatprep.subr.mxu0 0.0
        %3050 = vmatpush1.msra.mxu0 0.0
        %3051 = vmatprep.mubr.f32.mxu0 0.0
        %3052 = vmatmul.mubr.f32.gmra.mrb[0].mxu0 %v2979
        %v3053 = vpop.f32.mrb[0].mxu0
        %v3054 = vadd.f32 0.0, %v3053
        %v3055 = vpop.f32.mrb[0].mxu0
        %v3056 = vadd.f32 0.0, %v3055
        %3057 = vdwg.mxu0
        %v3058 = vadd.f32 %v2728, %v3054
        %v3059 = vadd.f32 %v2729, %v3056
        %v3060 = vld [vmem:[%s2] sm:$0xff]
        %3062 = vset.pattern.permute.xlu0 0
        %3063 = vperm.xlu0 %3062, %v3060
        %v3064 = vpop.permute.xlu0 %3063
        %v3066 = vadd.f32 %v3058, %v3064
        %v3067 = vadd.f32 %v3059, %v3064
        %vm3068 = vcmp.ge.f32.partialorder %v3066, 0.0
        %vm3069 = vcmp.ge.f32.partialorder %v3067, 0.0
        %v3070 = vmul.f32 %v3066, 0.1
        %v3071 = vmul.f32 %v3067, 0.1
        %v3072 = vsel %vm3068, %v3066, %v3070
        %v3073 = vsel %vm3069, %v3067, %v3071
        %3074 = vst [vmem:[%s177] sm:$0xff] %v3072
        %3075 = vst [vmem:[%s177 + $0x8] sm:$0xff] %v3073
        %s3076 = sand.u32 %s107, 1
        %s3077 = scalar_lea.sflag [#allocation3], %s3076
        %s3078 = sand.u32 %s107, 1
        %s3079 = smul.addr %s3078, 16
        %s3080 = scalar_lea.vmem [#allocation2], %s3079
        // Predicated region
        $region33: #{tpu_custom_call.1} parent=31 // pred_check
          %p3081 = pneg %p117
        $region34: #{tpu_custom_call.1} parent=31 // pred_check_branch
          %3083 = sbr.rel (%p3081) target = $region36
        $region35: #{tpu_custom_call.1} parent=31 // pred_region
          %s3084 = smul.u32 2, %s22
          %s3086 = ssub.s32 256, 256
          %3087 = vsyncadd %s3077, %s3086
          %s3088 = smul.addr %s21, 2
          %s3089 = sadd.s32 %s3084, %s3088
          %s3090 = smul.addr %s3089, 128
          %s3091 = scalar_lea.hbm %s3, %s3090
          %s3093 = sshll.u32 %s3080, 4
          %s3094 = int_to_ptr.vmem [resolvable:$true] %s3093
          %3096 = dma.vmem_to_hbm [thread:$0]  %s3094, 256, %s3091, %s3077
        $region36: #{tpu_custom_call.1} parent=31 // pred_fallthru
          _
      $region32: #{tpu_custom_call.1} parent=5 // pred_fallthru
        _
      %p3097 = scmp.le.s32.totalorder 2, %s12
      // Predicated region
      $region37: #{tpu_custom_call.1} parent=5 // pred_check
        %p3098 = pneg %p3097
      $region38: #{tpu_custom_call.1} parent=5 // pred_check_branch
        %3100 = sbr.rel (%p3098) target = $region40
      $region39: #{tpu_custom_call.1} parent=5 // pred_region
        %s3101 = ssub.s32 %s12, 2
        // Predicated region
        $region41: #{tpu_custom_call.1} parent=39 // pred_check
          %p3102 = pneg %p123
        $region42: #{tpu_custom_call.1} parent=39 // pred_check_branch
          %3104 = sbr.rel (%p3102) target = $region44
        $region43: #{tpu_custom_call.1} parent=39 // pred_region
          %s3105 = sand.u32 %s108, 1
          %s3106 = scalar_lea.sflag [#allocation3], %s3105
          %s3107 = sand.u32 %s108, 1
          %s3108 = smul.addr %s3107, 16
          %s3109 = scalar_lea.vmem [#allocation2], %s3108
          %3110 = dma.done %s3106, 256
        $region44: #{tpu_custom_call.1} parent=39 // pred_fallthru
          _
      $region40: #{tpu_custom_call.1} parent=5 // pred_fallthru
        _
    $region6: #{tpu_custom_call.1} parent=1 // loop_footer
      %s16 = sadd.s32 1, %s12
    $region7: #{tpu_custom_call.1} parent=1 // loop_footer_branch
      %11 = sbr.rel target = $region3
    $region8: #{tpu_custom_call.1} parent=1 // loop_exit
      _
    %3111 = vsyncpa [#allocation3], 1
    %s3112 = scalar_lea.sflag [#allocation3], 1
    %3113 = vsyncpa %s3112, 1

</llo_original>
